<compile_context>
chip_gen: v7x
topology: tpu7x:2x2x1
jax: 0.10.0
libtpu: 0.0.40
codegen_flags: <defaults>
</compile_context>

<pallas_src>
import functools

import jax
import jax.numpy as jnp
from jax import lax
from jax.experimental import pallas as pl
from jax.experimental.pallas import tpu as pltpu


def _mha_kernel(xq_ref, k_ref, v_ref, wq_ref, bq_ref, wo_ref, bo_ref,
                o_ref, acc_ref, *, heads_per_step):
    """One (batch, query-tile, head-group) grid step.

    xq_ref : (1, TQ, D)      bf16 query rows of this tile
    k_ref  : (1, hp, S, dh)  bf16 keys of this head group
    v_ref  : (1, hp, S, dh)  bf16 values of this head group
    wq_ref : (head, D, dh)   bf16 Wq^T (softmax scale folded in), VMEM-resident
    bq_ref : (head, 1, dh)   f32  bq (scale folded in),           VMEM-resident
    wo_ref : (head, dh, D)   bf16 Wo^T rows per head,             VMEM-resident
    bo_ref : (1, D)          f32  output bias
    acc_ref: (TQ, D)         f32  accumulator over heads (VMEM scratch)
    """
    g = pl.program_id(2)
    n_g = pl.num_programs(2)

    @pl.when(g == 0)
    def _init():
        acc_ref[...] = jnp.zeros_like(acc_ref)

    xq = xq_ref[0]                                      # (TQ, D) bf16

    for i in range(heads_per_step):                     # static unroll
        h = g * heads_per_step + i                      # global head index
        wq = wq_ref[h]                                  # (D, dh)  bf16
        bq = bq_ref[h]                                  # (1, dh)  f32
        wo = wo_ref[h]                                  # (dh, D)  bf16
        k = k_ref[0, i]                                 # (S, dh)  bf16
        v = v_ref[0, i]                                 # (S, dh)  bf16

        # Query projection; 1/sqrt(dh) already folded into wq/bq.
        q = jnp.dot(xq, wq, preferred_element_type=jnp.float32) + bq      # (TQ, dh)

        # scores = q @ k^T without materializing a transposed K tile.
        s = lax.dot_general(q.astype(k.dtype), k, (((1,), (1,)), ((), ())),
                            preferred_element_type=jnp.float32)           # (TQ, S)

        # Numerically-stable softmax; reciprocal goes to the EUP slot.
        s = s - jnp.max(s, axis=-1, keepdims=True)
        e = jnp.exp(s)
        att = e * pl.reciprocal(jnp.sum(e, axis=-1, keepdims=True), approx=True)

        ctx = jnp.dot(att.astype(v.dtype), v,
                      preferred_element_type=jnp.float32)                 # (TQ, dh)

        # Per-head slice of the output projection, accumulated across heads.
        acc_ref[...] += jnp.dot(ctx.astype(wo.dtype), wo,
                                preferred_element_type=jnp.float32)       # (TQ, D)

    @pl.when(g == n_g - 1)
    def _finalize():
        o_ref[0] = (acc_ref[...] + bo_ref[...]).astype(o_ref.dtype)


def _choose_q_tile(seq_len, max_tile=512):
    """Largest multiple-of-8 divisor of S that is <= max_tile (or S itself)."""
    if seq_len <= max_tile:
        return seq_len
    for tq in range(max_tile, 7, -8):
        if seq_len % tq == 0:
            return tq
    # TODO(synk): pad the sequence instead of falling back to a full-S tile.
    return seq_len


def _choose_heads_per_step(head, d_head, target=256):
    """Batch heads per grid step so fused per-step work approaches MXU width."""
    hp = min(head, max(1, target // max(d_head, 1)))
    while head % hp != 0:
        hp -= 1
    return hp


def self_attention(x, params, *, head, compute_dtype=jnp.bfloat16):
    """x: (B, S, D) float32; params: PyTorch-layout weights/biases."""
    B, S, D = x.shape
    assert D % head == 0, "d_model must be divisible by head"
    d_head = D // head
    tq = _choose_q_tile(S)
    n_q = S // tq
    hp = _choose_heads_per_step(head, d_head)
    n_g = head // hp
    scale = 1.0 / (d_head ** 0.5)

    # --- one-time packing + hoisted K/V projections (plain XLA, outside kernel) ---
    def per_head_cols(w):                                # (D_out, D_in) PyTorch layout
        return w.T.reshape(D, head, d_head).transpose(1, 0, 2)           # (head, D, dh)

    wq_h = (per_head_cols(params["wq"]) * scale).astype(compute_dtype)   # (head, D, dh)
    bq_h = params["bq"].reshape(head, d_head)[:, None, :] * scale        # (head, 1, dh) f32
    wo_h = params["wo"].T.reshape(head, d_head, D).astype(compute_dtype) # (head, dh, D)
    bo = params["bo"].astype(jnp.float32)                                # (1, D)

    def project_heads(w, b):                             # full-precision projection, once
        y = x @ w.T + b                                                  # (B, S, D) f32
        return y.reshape(B, S, head, d_head).transpose(0, 2, 1, 3)       # (B, head, S, dh)

    k_heads = project_heads(params["wk"], params["bk"]).astype(compute_dtype)
    v_heads = project_heads(params["wv"], params["bv"]).astype(compute_dtype)
    x_q = x.astype(compute_dtype)

    kernel = functools.partial(_mha_kernel, heads_per_step=hp)

    # VMEM-resident (constant block index -> fetched from HBM once).
    resident = lambda shp: pl.BlockSpec(shp, lambda b, qi, g, _s=shp: (0,) * len(_s))

    return pl.pallas_call(
        kernel,
        out_shape=jax.ShapeDtypeStruct((B, S, D), x.dtype),
        grid_spec=pltpu.PrefetchScalarGridSpec(
            num_scalar_prefetch=0,
            grid=(B, n_q, n_g),
            in_specs=[
                pl.BlockSpec((1, tq, D), lambda b, qi, g: (b, qi, 0)),            # x (query rows)
                pl.BlockSpec((1, hp, S, d_head), lambda b, qi, g: (b, g, 0, 0)),  # K head group
                pl.BlockSpec((1, hp, S, d_head), lambda b, qi, g: (b, g, 0, 0)),  # V head group
                resident((head, D, d_head)),                                      # Wq^T * scale
                resident((head, 1, d_head)),                                      # bq * scale
                resident((head, d_head, D)),                                      # Wo^T
                resident((1, D)),                                                 # bo
            ],
            out_specs=pl.BlockSpec((1, tq, D), lambda b, qi, g: (b, qi, 0)),
            scratch_shapes=[pltpu.VMEM((tq, D), jnp.float32)],
        ),
        compiler_params=pltpu.CompilerParams(
            dimension_semantics=("parallel", "parallel", "arbitrary"),
            vmem_limit_bytes=48 * 1024 * 1024),
    )(x_q, k_heads, v_heads, wq_h, bq_h, wo_h, bo)


def _reference(x, params, *, head):
    """Pure-JAX reference mirroring the PyTorch MultiHeadAttention forward (eval)."""
    B, S, D = x.shape
    dh = D // head
    proj = lambda w, b: x @ w.T + b
    q = proj(params["wq"], params["bq"]).reshape(B, S, head, dh).transpose(0, 2, 1, 3)
    k = proj(params["wk"], params["bk"]).reshape(B, S, head, dh).transpose(0, 2, 1, 3)
    v = proj(params["wv"], params["bv"]).reshape(B, S, head, dh).transpose(0, 2, 1, 3)
    s = jnp.einsum("bhqd,bhkd->bhqk", q, k) / jnp.sqrt(jnp.float32(dh))
    a = jax.nn.softmax(s, axis=-1)
    ctx = jnp.einsum("bhqk,bhkd->bhqd", a, v)
    ctx = ctx.transpose(0, 2, 1, 3).reshape(B, S, D)
    return ctx @ params["wo"].T + params["bo"]


def _init_params(key, d_model):
    """Deterministic PyTorch-nn.Linear-style init: U(-1/sqrt(fan_in), 1/sqrt(fan_in))."""
    bound = 1.0 / jnp.sqrt(jnp.float32(d_model))
    keys = jax.random.split(key, 8)
    u = lambda k, shp: jax.random.uniform(k, shp, jnp.float32, -bound, bound)
    return {
        "wq": u(keys[0], (d_model, d_model)), "bq": u(keys[1], (1, d_model)),
        "wk": u(keys[2], (d_model, d_model)), "bk": u(keys[3], (1, d_model)),
        "wv": u(keys[4], (d_model, d_model)), "bv": u(keys[5], (1, d_model)),
        "wo": u(keys[6], (d_model, d_model)), "bo": u(keys[7], (1, d_model)),
    }


if __name__ == "__main__":
    B, S, D, HEAD = 2, 8, 32, 4

    key = jax.random.PRNGKey(0)
    kx, kp = jax.random.split(key)
    x = jax.random.normal(kx, (B, S, D), jnp.float32)
    params = _init_params(kp, D)

    # Default (bf16 MXU operands, f32 accumulation) path.
    out_bf16 = jax.block_until_ready(self_attention(x, params, head=HEAD))
    # Exact-precision path (same kernel, f32 operands) for a tight parity check.
    out_f32 = jax.block_until_ready(
        self_attention(x, params, head=HEAD, compute_dtype=jnp.float32))
    ref = _reference(x, params, head=HEAD)

    assert out_bf16.shape == (B, S, D)
    # f32 path: only the EUP approximate reciprocal differs from the reference.
    assert jnp.allclose(out_f32, ref, atol=5e-3, rtol=5e-3), "f32 mismatch vs reference"
    # bf16 path: tolerance loosened for bf16 operand rounding.
    assert jnp.allclose(out_bf16, ref, atol=5e-2, rtol=5e-2), "bf16 mismatch vs reference"

    print("KERNEL_OK")
</pallas_src>

<mosaic_0001>
module attributes {stable_mosaic.version = 11 : i64} {
  func.func @_mha_kernel(%arg0: i32, %arg1: i32, %arg2: i32, %arg3: memref<1x8x32xbf16, #tpu.memory_space<vmem>>, %arg4: memref<1x4x8x8xbf16, #tpu.memory_space<vmem>>, %arg5: memref<1x4x8x8xbf16, #tpu.memory_space<vmem>>, %arg6: memref<4x32x8xbf16, #tpu.memory_space<vmem>>, %arg7: memref<4x1x8xf32, #tpu.memory_space<vmem>>, %arg8: memref<4x8x32xbf16, #tpu.memory_space<vmem>>, %arg9: memref<1x32xf32, #tpu.memory_space<vmem>>, %arg10: memref<1x8x32xf32, #tpu.memory_space<vmem>>, %arg11: memref<8x32xf32, #tpu.memory_space<vmem>>) attributes {dimension_semantics = [#tpu.dimension_semantics<parallel>, #tpu.dimension_semantics<parallel>, #tpu.dimension_semantics<arbitrary>], iteration_bounds = array<i64: 2, 1, 1>, scalar_prefetch = 0 : i64, scratch_operands = 1 : i64, tpu.core_type = #tpu.core_type<tc>, window_params = [{transform_indices = @transform_0, window_bounds = array<i64: 1, 8, 32>}, {transform_indices = @transform_1, window_bounds = array<i64: 1, 4, 8, 8>}, {transform_indices = @transform_2, window_bounds = array<i64: 1, 4, 8, 8>}, {pipeline_mode = #tpu.pipeline_mode<synchronous>, transform_indices = @transform_3, window_bounds = array<i64: 4, 32, 8>}, {pipeline_mode = #tpu.pipeline_mode<synchronous>, transform_indices = @transform_4, window_bounds = array<i64: 4, 1, 8>}, {pipeline_mode = #tpu.pipeline_mode<synchronous>, transform_indices = @transform_5, window_bounds = array<i64: 4, 8, 32>}, {pipeline_mode = #tpu.pipeline_mode<synchronous>, transform_indices = @transform_6, window_bounds = array<i64: 1, 32>}, {transform_indices = @transform_7, window_bounds = array<i64: 1, 8, 32>}]} {
    %c0_i32 = arith.constant 0 : i32
    %0 = arith.cmpi eq, %arg2, %c0_i32 : i32
    %1 = arith.extui %0 : i1 to i32
    %c0_i32_0 = arith.constant 0 : i32
    %2 = arith.cmpi ne, %1, %c0_i32_0 : i32
    scf.if %2 {
      %cst_101 = arith.constant 0.000000e+00 : f32
      %156 = vector.broadcast %cst_101 : f32 to vector<8x32xf32>
      %c0_102 = arith.constant 0 : index
      %c0_103 = arith.constant 0 : index
      %157 = vector.load %arg11[%c0_102, %c0_103] : memref<8x32xf32, #tpu.memory_space<vmem>>, vector<8x32xf32>
      tpu.vector_store %arg11[%c0_102, %c0_103], %156 {strides = array<i32>} : memref<8x32xf32, #tpu.memory_space<vmem>>, vector<8x32xf32>,
    } else {
    }
    %c0 = arith.constant 0 : index
    %c0_1 = arith.constant 0 : index
    %c0_2 = arith.constant 0 : index
    %3 = vector.load %arg3[%c0, %c0_1, %c0_2] : memref<1x8x32xbf16, #tpu.memory_space<vmem>>, vector<1x8x32xbf16>
    %4 = vector.shape_cast %3 : vector<1x8x32xbf16> to vector<8x32xbf16>
    %c4_i32 = arith.constant 4 : i32
    %5 = arith.muli %arg2, %c4_i32 : i32
    %c0_i32_3 = arith.constant 0 : i32
    %6 = arith.addi %5, %c0_i32_3 : i32
    %7 = arith.index_cast %6 : i32 to index
    %c0_4 = arith.constant 0 : index
    %c0_5 = arith.constant 0 : index
    %8 = vector.load %arg6[%7, %c0_4, %c0_5] : memref<4x32x8xbf16, #tpu.memory_space<vmem>>, vector<1x32x8xbf16>
    %9 = vector.shape_cast %8 : vector<1x32x8xbf16> to vector<32x8xbf16>
    %10 = arith.index_cast %6 : i32 to index
    %c0_6 = arith.constant 0 : index
    %c0_7 = arith.constant 0 : index
    %11 = vector.load %arg7[%10, %c0_6, %c0_7] : memref<4x1x8xf32, #tpu.memory_space<vmem>>, vector<1x1x8xf32>
    %12 = vector.shape_cast %11 : vector<1x1x8xf32> to vector<1x8xf32>
    %13 = arith.index_cast %6 : i32 to index
    %c0_8 = arith.constant 0 : index
    %c0_9 = arith.constant 0 : index
    %14 = vector.load %arg8[%13, %c0_8, %c0_9] : memref<4x8x32xbf16, #tpu.memory_space<vmem>>, vector<1x8x32xbf16>
    %15 = vector.shape_cast %14 : vector<1x8x32xbf16> to vector<8x32xbf16>
    %c0_10 = arith.constant 0 : index
    %c0_11 = arith.constant 0 : index
    %c0_12 = arith.constant 0 : index
    %c0_13 = arith.constant 0 : index
    %16 = vector.load %arg4[%c0_10, %c0_11, %c0_12, %c0_13] : memref<1x4x8x8xbf16, #tpu.memory_space<vmem>>, vector<1x1x8x8xbf16>
    %17 = vector.shape_cast %16 : vector<1x1x8x8xbf16> to vector<8x8xbf16>
    %c0_14 = arith.constant 0 : index
    %c0_15 = arith.constant 0 : index
    %c0_16 = arith.constant 0 : index
    %c0_17 = arith.constant 0 : index
    %18 = vector.load %arg5[%c0_14, %c0_15, %c0_16, %c0_17] : memref<1x4x8x8xbf16, #tpu.memory_space<vmem>>, vector<1x1x8x8xbf16>
    %19 = vector.shape_cast %18 : vector<1x1x8x8xbf16> to vector<8x8xbf16>
    %cst = arith.constant dense<0.000000e+00> : vector<8x8xf32>
    %20 = tpu.matmul %4, %9, %cst {dimension_numbers = #tpu.dot_dimension_numbers<[1], [0], [0], [1], [0, 0, 1, 1], [], []>} : vector<8x32xbf16>, vector<32x8xbf16>, vector<8x8xf32> -> vector<8x8xf32>
    %21 = vector.broadcast %12 : vector<1x8xf32> to vector<8x8xf32>
    %22 = arith.addf %20, %21 : vector<8x8xf32>
    %23 = arith.truncf %22 : vector<8x8xf32> to vector<8x8xbf16>
    %cst_18 = arith.constant dense<0.000000e+00> : vector<8x8xf32>
    %24 = tpu.matmul %23, %17, %cst_18 {dimension_numbers = #tpu.dot_dimension_numbers<[1], [1], [0], [0], [0, 0, 1, 0], [], []>} : vector<8x8xbf16>, vector<8x8xbf16>, vector<8x8xf32> -> vector<8x8xf32>
    %cst_19 = arith.constant dense<0xFF800000> : vector<8xf32>
    %25 = vector.multi_reduction <maximumf>, %24, %cst_19 [1] : vector<8x8xf32> to vector<8xf32>
    %26 = vector.shape_cast %25 : vector<8xf32> to vector<8x1xf32>
    %27 = vector.broadcast %26 : vector<8x1xf32> to vector<8x8xf32>
    %28 = arith.subf %24, %27 : vector<8x8xf32>
    %29 = math.exp %28 : vector<8x8xf32>
    %cst_20 = arith.constant dense<0.000000e+00> : vector<8xf32>
    %30 = vector.multi_reduction <add>, %29, %cst_20 [1] : vector<8x8xf32> to vector<8xf32>
    %31 = vector.shape_cast %30 : vector<8xf32> to vector<8x1xf32>
    %32 = tpu.reciprocal %31 {approx = true} : vector<8x1xf32> -> vector<8x1xf32>
    %33 = vector.broadcast %32 : vector<8x1xf32> to vector<8x8xf32>
    %34 = arith.mulf %29, %33 : vector<8x8xf32>
    %35 = arith.truncf %34 : vector<8x8xf32> to vector<8x8xbf16>
    %cst_21 = arith.constant dense<0.000000e+00> : vector<8x8xf32>
    %36 = tpu.matmul %35, %19, %cst_21 {dimension_numbers = #tpu.dot_dimension_numbers<[1], [0], [0], [1], [0, 0, 1, 1], [], []>} : vector<8x8xbf16>, vector<8x8xbf16>, vector<8x8xf32> -> vector<8x8xf32>
    %c0_22 = arith.constant 0 : index
    %c0_23 = arith.constant 0 : index
    %37 = vector.load %arg11[%c0_22, %c0_23] : memref<8x32xf32, #tpu.memory_space<vmem>>, vector<8x32xf32>
    %38 = arith.truncf %36 : vector<8x8xf32> to vector<8x8xbf16>
    %cst_24 = arith.constant dense<0.000000e+00> : vector<8x32xf32>
    %39 = tpu.matmul %38, %15, %cst_24 {dimension_numbers = #tpu.dot_dimension_numbers<[1], [0], [0], [1], [0, 0, 1, 1], [], []>} : vector<8x8xbf16>, vector<8x32xbf16>, vector<8x32xf32> -> vector<8x32xf32>
    %40 = arith.addf %37, %39 : vector<8x32xf32>
    %c0_25 = arith.constant 0 : index
    %c0_26 = arith.constant 0 : index
    %41 = vector.load %arg11[%c0_25, %c0_26] : memref<8x32xf32, #tpu.memory_space<vmem>>, vector<8x32xf32>
    tpu.vector_store %arg11[%c0_25, %c0_26], %40 {strides = array<i32>} : memref<8x32xf32, #tpu.memory_space<vmem>>, vector<8x32xf32>,
    %c4_i32_27 = arith.constant 4 : i32
    %42 = arith.muli %arg2, %c4_i32_27 : i32
    %c1_i32 = arith.constant 1 : i32
    %43 = arith.addi %42, %c1_i32 : i32
    %44 = arith.index_cast %43 : i32 to index
    %c0_28 = arith.constant 0 : index
    %c0_29 = arith.constant 0 : index
    %45 = vector.load %arg6[%44, %c0_28, %c0_29] : memref<4x32x8xbf16, #tpu.memory_space<vmem>>, vector<1x32x8xbf16>
    %46 = vector.shape_cast %45 : vector<1x32x8xbf16> to vector<32x8xbf16>
    %47 = arith.index_cast %43 : i32 to index
    %c0_30 = arith.constant 0 : index
    %c0_31 = arith.constant 0 : index
    %48 = vector.load %arg7[%47, %c0_30, %c0_31] : memref<4x1x8xf32, #tpu.memory_space<vmem>>, vector<1x1x8xf32>
    %49 = vector.shape_cast %48 : vector<1x1x8xf32> to vector<1x8xf32>
    %50 = arith.index_cast %43 : i32 to index
    %c0_32 = arith.constant 0 : index
    %c0_33 = arith.constant 0 : index
    %51 = vector.load %arg8[%50, %c0_32, %c0_33] : memref<4x8x32xbf16, #tpu.memory_space<vmem>>, vector<1x8x32xbf16>
    %52 = vector.shape_cast %51 : vector<1x8x32xbf16> to vector<8x32xbf16>
    %c0_34 = arith.constant 0 : index
    %c1 = arith.constant 1 : index
    %c0_35 = arith.constant 0 : index
    %c0_36 = arith.constant 0 : index
    %53 = vector.load %arg4[%c0_34, %c1, %c0_35, %c0_36] : memref<1x4x8x8xbf16, #tpu.memory_space<vmem>>, vector<1x1x8x8xbf16>
    %54 = vector.shape_cast %53 : vector<1x1x8x8xbf16> to vector<8x8xbf16>
    %c0_37 = arith.constant 0 : index
    %c1_38 = arith.constant 1 : index
    %c0_39 = arith.constant 0 : index
    %c0_40 = arith.constant 0 : index
    %55 = vector.load %arg5[%c0_37, %c1_38, %c0_39, %c0_40] : memref<1x4x8x8xbf16, #tpu.memory_space<vmem>>, vector<1x1x8x8xbf16>
    %56 = vector.shape_cast %55 : vector<1x1x8x8xbf16> to vector<8x8xbf16>
    %cst_41 = arith.constant dense<0.000000e+00> : vector<8x8xf32>
    %57 = tpu.matmul %4, %46, %cst_41 {dimension_numbers = #tpu.dot_dimension_numbers<[1], [0], [0], [1], [0, 0, 1, 1], [], []>} : vector<8x32xbf16>, vector<32x8xbf16>, vector<8x8xf32> -> vector<8x8xf32>
    %58 = vector.broadcast %49 : vector<1x8xf32> to vector<8x8xf32>
    %59 = arith.addf %57, %58 : vector<8x8xf32>
    %60 = arith.truncf %59 : vector<8x8xf32> to vector<8x8xbf16>
    %cst_42 = arith.constant dense<0.000000e+00> : vector<8x8xf32>
    %61 = tpu.matmul %60, %54, %cst_42 {dimension_numbers = #tpu.dot_dimension_numbers<[1], [1], [0], [0], [0, 0, 1, 0], [], []>} : vector<8x8xbf16>, vector<8x8xbf16>, vector<8x8xf32> -> vector<8x8xf32>
    %cst_43 = arith.constant dense<0xFF800000> : vector<8xf32>
    %62 = vector.multi_reduction <maximumf>, %61, %cst_43 [1] : vector<8x8xf32> to vector<8xf32>
    %63 = vector.shape_cast %62 : vector<8xf32> to vector<8x1xf32>
    %64 = vector.broadcast %63 : vector<8x1xf32> to vector<8x8xf32>
    %65 = arith.subf %61, %64 : vector<8x8xf32>
    %66 = math.exp %65 : vector<8x8xf32>
    %cst_44 = arith.constant dense<0.000000e+00> : vector<8xf32>
    %67 = vector.multi_reduction <add>, %66, %cst_44 [1] : vector<8x8xf32> to vector<8xf32>
    %68 = vector.shape_cast %67 : vector<8xf32> to vector<8x1xf32>
    %69 = tpu.reciprocal %68 {approx = true} : vector<8x1xf32> -> vector<8x1xf32>
    %70 = vector.broadcast %69 : vector<8x1xf32> to vector<8x8xf32>
    %71 = arith.mulf %66, %70 : vector<8x8xf32>
    %72 = arith.truncf %71 : vector<8x8xf32> to vector<8x8xbf16>
    %cst_45 = arith.constant dense<0.000000e+00> : vector<8x8xf32>
    %73 = tpu.matmul %72, %56, %cst_45 {dimension_numbers = #tpu.dot_dimension_numbers<[1], [0], [0], [1], [0, 0, 1, 1], [], []>} : vector<8x8xbf16>, vector<8x8xbf16>, vector<8x8xf32> -> vector<8x8xf32>
    %c0_46 = arith.constant 0 : index
    %c0_47 = arith.constant 0 : index
    %74 = vector.load %arg11[%c0_46, %c0_47] : memref<8x32xf32, #tpu.memory_space<vmem>>, vector<8x32xf32>
    %75 = arith.truncf %73 : vector<8x8xf32> to vector<8x8xbf16>
    %cst_48 = arith.constant dense<0.000000e+00> : vector<8x32xf32>
    %76 = tpu.matmul %75, %52, %cst_48 {dimension_numbers = #tpu.dot_dimension_numbers<[1], [0], [0], [1], [0, 0, 1, 1], [], []>} : vector<8x8xbf16>, vector<8x32xbf16>, vector<8x32xf32> -> vector<8x32xf32>
    %77 = arith.addf %74, %76 : vector<8x32xf32>
    %c0_49 = arith.constant 0 : index
    %c0_50 = arith.constant 0 : index
    %78 = vector.load %arg11[%c0_49, %c0_50] : memref<8x32xf32, #tpu.memory_space<vmem>>, vector<8x32xf32>
    tpu.vector_store %arg11[%c0_49, %c0_50], %77 {strides = array<i32>} : memref<8x32xf32, #tpu.memory_space<vmem>>, vector<8x32xf32>,
    %c4_i32_51 = arith.constant 4 : i32
    %79 = arith.muli %arg2, %c4_i32_51 : i32
    %c2_i32 = arith.constant 2 : i32
    %80 = arith.addi %79, %c2_i32 : i32
    %81 = arith.index_cast %80 : i32 to index
    %c0_52 = arith.constant 0 : index
    %c0_53 = arith.constant 0 : index
    %82 = vector.load %arg6[%81, %c0_52, %c0_53] : memref<4x32x8xbf16, #tpu.memory_space<vmem>>, vector<1x32x8xbf16>
    %83 = vector.shape_cast %82 : vector<1x32x8xbf16> to vector<32x8xbf16>
    %84 = arith.index_cast %80 : i32 to index
    %c0_54 = arith.constant 0 : index
    %c0_55 = arith.constant 0 : index
    %85 = vector.load %arg7[%84, %c0_54, %c0_55] : memref<4x1x8xf32, #tpu.memory_space<vmem>>, vector<1x1x8xf32>
    %86 = vector.shape_cast %85 : vector<1x1x8xf32> to vector<1x8xf32>
    %87 = arith.index_cast %80 : i32 to index
    %c0_56 = arith.constant 0 : index
    %c0_57 = arith.constant 0 : index
    %88 = vector.load %arg8[%87, %c0_56, %c0_57] : memref<4x8x32xbf16, #tpu.memory_space<vmem>>, vector<1x8x32xbf16>
    %89 = vector.shape_cast %88 : vector<1x8x32xbf16> to vector<8x32xbf16>
    %c0_58 = arith.constant 0 : index
    %c2 = arith.constant 2 : index
    %c0_59 = arith.constant 0 : index
    %c0_60 = arith.constant 0 : index
    %90 = vector.load %arg4[%c0_58, %c2, %c0_59, %c0_60] : memref<1x4x8x8xbf16, #tpu.memory_space<vmem>>, vector<1x1x8x8xbf16>
    %91 = vector.shape_cast %90 : vector<1x1x8x8xbf16> to vector<8x8xbf16>
    %c0_61 = arith.constant 0 : index
    %c2_62 = arith.constant 2 : index
    %c0_63 = arith.constant 0 : index
    %c0_64 = arith.constant 0 : index
    %92 = vector.load %arg5[%c0_61, %c2_62, %c0_63, %c0_64] : memref<1x4x8x8xbf16, #tpu.memory_space<vmem>>, vector<1x1x8x8xbf16>
    %93 = vector.shape_cast %92 : vector<1x1x8x8xbf16> to vector<8x8xbf16>
    %cst_65 = arith.constant dense<0.000000e+00> : vector<8x8xf32>
    %94 = tpu.matmul %4, %83, %cst_65 {dimension_numbers = #tpu.dot_dimension_numbers<[1], [0], [0], [1], [0, 0, 1, 1], [], []>} : vector<8x32xbf16>, vector<32x8xbf16>, vector<8x8xf32> -> vector<8x8xf32>
    %95 = vector.broadcast %86 : vector<1x8xf32> to vector<8x8xf32>
    %96 = arith.addf %94, %95 : vector<8x8xf32>
    %97 = arith.truncf %96 : vector<8x8xf32> to vector<8x8xbf16>
    %cst_66 = arith.constant dense<0.000000e+00> : vector<8x8xf32>
    %98 = tpu.matmul %97, %91, %cst_66 {dimension_numbers = #tpu.dot_dimension_numbers<[1], [1], [0], [0], [0, 0, 1, 0], [], []>} : vector<8x8xbf16>, vector<8x8xbf16>, vector<8x8xf32> -> vector<8x8xf32>
    %cst_67 = arith.constant dense<0xFF800000> : vector<8xf32>
    %99 = vector.multi_reduction <maximumf>, %98, %cst_67 [1] : vector<8x8xf32> to vector<8xf32>
    %100 = vector.shape_cast %99 : vector<8xf32> to vector<8x1xf32>
    %101 = vector.broadcast %100 : vector<8x1xf32> to vector<8x8xf32>
    %102 = arith.subf %98, %101 : vector<8x8xf32>
    %103 = math.exp %102 : vector<8x8xf32>
    %cst_68 = arith.constant dense<0.000000e+00> : vector<8xf32>
    %104 = vector.multi_reduction <add>, %103, %cst_68 [1] : vector<8x8xf32> to vector<8xf32>
    %105 = vector.shape_cast %104 : vector<8xf32> to vector<8x1xf32>
    %106 = tpu.reciprocal %105 {approx = true} : vector<8x1xf32> -> vector<8x1xf32>
    %107 = vector.broadcast %106 : vector<8x1xf32> to vector<8x8xf32>
    %108 = arith.mulf %103, %107 : vector<8x8xf32>
    %109 = arith.truncf %108 : vector<8x8xf32> to vector<8x8xbf16>
    %cst_69 = arith.constant dense<0.000000e+00> : vector<8x8xf32>
    %110 = tpu.matmul %109, %93, %cst_69 {dimension_numbers = #tpu.dot_dimension_numbers<[1], [0], [0], [1], [0, 0, 1, 1], [], []>} : vector<8x8xbf16>, vector<8x8xbf16>, vector<8x8xf32> -> vector<8x8xf32>
    %c0_70 = arith.constant 0 : index
    %c0_71 = arith.constant 0 : index
    %111 = vector.load %arg11[%c0_70, %c0_71] : memref<8x32xf32, #tpu.memory_space<vmem>>, vector<8x32xf32>
    %112 = arith.truncf %110 : vector<8x8xf32> to vector<8x8xbf16>
    %cst_72 = arith.constant dense<0.000000e+00> : vector<8x32xf32>
    %113 = tpu.matmul %112, %89, %cst_72 {dimension_numbers = #tpu.dot_dimension_numbers<[1], [0], [0], [1], [0, 0, 1, 1], [], []>} : vector<8x8xbf16>, vector<8x32xbf16>, vector<8x32xf32> -> vector<8x32xf32>
    %114 = arith.addf %111, %113 : vector<8x32xf32>
    %c0_73 = arith.constant 0 : index
    %c0_74 = arith.constant 0 : index
    %115 = vector.load %arg11[%c0_73, %c0_74] : memref<8x32xf32, #tpu.memory_space<vmem>>, vector<8x32xf32>
    tpu.vector_store %arg11[%c0_73, %c0_74], %114 {strides = array<i32>} : memref<8x32xf32, #tpu.memory_space<vmem>>, vector<8x32xf32>,
    %c4_i32_75 = arith.constant 4 : i32
    %116 = arith.muli %arg2, %c4_i32_75 : i32
    %c3_i32 = arith.constant 3 : i32
    %117 = arith.addi %116, %c3_i32 : i32
    %118 = arith.index_cast %117 : i32 to index
    %c0_76 = arith.constant 0 : index
    %c0_77 = arith.constant 0 : index
    %119 = vector.load %arg6[%118, %c0_76, %c0_77] : memref<4x32x8xbf16, #tpu.memory_space<vmem>>, vector<1x32x8xbf16>
    %120 = vector.shape_cast %119 : vector<1x32x8xbf16> to vector<32x8xbf16>
    %121 = arith.index_cast %117 : i32 to index
    %c0_78 = arith.constant 0 : index
    %c0_79 = arith.constant 0 : index
    %122 = vector.load %arg7[%121, %c0_78, %c0_79] : memref<4x1x8xf32, #tpu.memory_space<vmem>>, vector<1x1x8xf32>
    %123 = vector.shape_cast %122 : vector<1x1x8xf32> to vector<1x8xf32>
    %124 = arith.index_cast %117 : i32 to index
    %c0_80 = arith.constant 0 : index
    %c0_81 = arith.constant 0 : index
    %125 = vector.load %arg8[%124, %c0_80, %c0_81] : memref<4x8x32xbf16, #tpu.memory_space<vmem>>, vector<1x8x32xbf16>
    %126 = vector.shape_cast %125 : vector<1x8x32xbf16> to vector<8x32xbf16>
    %c0_82 = arith.constant 0 : index
    %c3 = arith.constant 3 : index
    %c0_83 = arith.constant 0 : index
    %c0_84 = arith.constant 0 : index
    %127 = vector.load %arg4[%c0_82, %c3, %c0_83, %c0_84] : memref<1x4x8x8xbf16, #tpu.memory_space<vmem>>, vector<1x1x8x8xbf16>
    %128 = vector.shape_cast %127 : vector<1x1x8x8xbf16> to vector<8x8xbf16>
    %c0_85 = arith.constant 0 : index
    %c3_86 = arith.constant 3 : index
    %c0_87 = arith.constant 0 : index
    %c0_88 = arith.constant 0 : index
    %129 = vector.load %arg5[%c0_85, %c3_86, %c0_87, %c0_88] : memref<1x4x8x8xbf16, #tpu.memory_space<vmem>>, vector<1x1x8x8xbf16>
    %130 = vector.shape_cast %129 : vector<1x1x8x8xbf16> to vector<8x8xbf16>
    %cst_89 = arith.constant dense<0.000000e+00> : vector<8x8xf32>
    %131 = tpu.matmul %4, %120, %cst_89 {dimension_numbers = #tpu.dot_dimension_numbers<[1], [0], [0], [1], [0, 0, 1, 1], [], []>} : vector<8x32xbf16>, vector<32x8xbf16>, vector<8x8xf32> -> vector<8x8xf32>
    %132 = vector.broadcast %123 : vector<1x8xf32> to vector<8x8xf32>
    %133 = arith.addf %131, %132 : vector<8x8xf32>
    %134 = arith.truncf %133 : vector<8x8xf32> to vector<8x8xbf16>
    %cst_90 = arith.constant dense<0.000000e+00> : vector<8x8xf32>
    %135 = tpu.matmul %134, %128, %cst_90 {dimension_numbers = #tpu.dot_dimension_numbers<[1], [1], [0], [0], [0, 0, 1, 0], [], []>} : vector<8x8xbf16>, vector<8x8xbf16>, vector<8x8xf32> -> vector<8x8xf32>
    %cst_91 = arith.constant dense<0xFF800000> : vector<8xf32>
    %136 = vector.multi_reduction <maximumf>, %135, %cst_91 [1] : vector<8x8xf32> to vector<8xf32>
    %137 = vector.shape_cast %136 : vector<8xf32> to vector<8x1xf32>
    %138 = vector.broadcast %137 : vector<8x1xf32> to vector<8x8xf32>
    %139 = arith.subf %135, %138 : vector<8x8xf32>
    %140 = math.exp %139 : vector<8x8xf32>
    %cst_92 = arith.constant dense<0.000000e+00> : vector<8xf32>
    %141 = vector.multi_reduction <add>, %140, %cst_92 [1] : vector<8x8xf32> to vector<8xf32>
    %142 = vector.shape_cast %141 : vector<8xf32> to vector<8x1xf32>
    %143 = tpu.reciprocal %142 {approx = true} : vector<8x1xf32> -> vector<8x1xf32>
    %144 = vector.broadcast %143 : vector<8x1xf32> to vector<8x8xf32>
    %145 = arith.mulf %140, %144 : vector<8x8xf32>
    %146 = arith.truncf %145 : vector<8x8xf32> to vector<8x8xbf16>
    %cst_93 = arith.constant dense<0.000000e+00> : vector<8x8xf32>
    %147 = tpu.matmul %146, %130, %cst_93 {dimension_numbers = #tpu.dot_dimension_numbers<[1], [0], [0], [1], [0, 0, 1, 1], [], []>} : vector<8x8xbf16>, vector<8x8xbf16>, vector<8x8xf32> -> vector<8x8xf32>
    %c0_94 = arith.constant 0 : index
    %c0_95 = arith.constant 0 : index
    %148 = vector.load %arg11[%c0_94, %c0_95] : memref<8x32xf32, #tpu.memory_space<vmem>>, vector<8x32xf32>
    %149 = arith.truncf %147 : vector<8x8xf32> to vector<8x8xbf16>
    %cst_96 = arith.constant dense<0.000000e+00> : vector<8x32xf32>
    %150 = tpu.matmul %149, %126, %cst_96 {dimension_numbers = #tpu.dot_dimension_numbers<[1], [0], [0], [1], [0, 0, 1, 1], [], []>} : vector<8x8xbf16>, vector<8x32xbf16>, vector<8x32xf32> -> vector<8x32xf32>
    %151 = arith.addf %148, %150 : vector<8x32xf32>
    %c0_97 = arith.constant 0 : index
    %c0_98 = arith.constant 0 : index
    %152 = vector.load %arg11[%c0_97, %c0_98] : memref<8x32xf32, #tpu.memory_space<vmem>>, vector<8x32xf32>
    tpu.vector_store %arg11[%c0_97, %c0_98], %151 {strides = array<i32>} : memref<8x32xf32, #tpu.memory_space<vmem>>, vector<8x32xf32>,
    %c0_i32_99 = arith.constant 0 : i32
    %153 = arith.cmpi eq, %arg2, %c0_i32_99 : i32
    %154 = arith.extui %153 : i1 to i32
    %c0_i32_100 = arith.constant 0 : i32
    %155 = arith.cmpi ne, %154, %c0_i32_100 : i32
    scf.if %155 {
      %c0_101 = arith.constant 0 : index
      %c0_102 = arith.constant 0 : index
      %156 = vector.load %arg11[%c0_101, %c0_102] : memref<8x32xf32, #tpu.memory_space<vmem>>, vector<8x32xf32>
      %c0_103 = arith.constant 0 : index
      %c0_104 = arith.constant 0 : index
      %157 = vector.load %arg9[%c0_103, %c0_104] : memref<1x32xf32, #tpu.memory_space<vmem>>, vector<1x32xf32>
      %158 = vector.broadcast %157 : vector<1x32xf32> to vector<8x32xf32>
      %159 = arith.addf %156, %158 : vector<8x32xf32>
      %c0_105 = arith.constant 0 : index
      %c0_106 = arith.constant 0 : index
      %c0_107 = arith.constant 0 : index
      %160 = vector.load %arg10[%c0_105, %c0_106, %c0_107] : memref<1x8x32xf32, #tpu.memory_space<vmem>>, vector<1x8x32xf32>
      %161 = vector.shape_cast %160 : vector<1x8x32xf32> to vector<8x32xf32>
      %162 = vector.shape_cast %159 : vector<8x32xf32> to vector<1x8x32xf32>
      tpu.vector_store %arg10[%c0_105, %c0_106, %c0_107], %162 {strides = array<i32>} : memref<1x8x32xf32, #tpu.memory_space<vmem>>, vector<1x8x32xf32>,
    } else {
    }
    return
  }
  func.func @transform_0(%arg0: i32, %arg1: i32, %arg2: i32) -> (i32, i32, i32) {
    %c0_i32 = arith.constant 0 : i32
    %c0_i32_0 = arith.constant 0 : i32
    return %arg0, %arg1, %c0_i32 : i32, i32, i32
  }
  func.func @transform_1(%arg0: i32, %arg1: i32, %arg2: i32) -> (i32, i32, i32, i32) {
    %c0_i32 = arith.constant 0 : i32
    %c0_i32_0 = arith.constant 0 : i32
    %c0_i32_1 = arith.constant 0 : i32
    return %arg0, %arg2, %c0_i32, %c0_i32_0 : i32, i32, i32, i32
  }
  func.func @transform_2(%arg0: i32, %arg1: i32, %arg2: i32) -> (i32, i32, i32, i32) {
    %c0_i32 = arith.constant 0 : i32
    %c0_i32_0 = arith.constant 0 : i32
    %c0_i32_1 = arith.constant 0 : i32
    return %arg0, %arg2, %c0_i32, %c0_i32_0 : i32, i32, i32, i32
  }
  func.func @transform_3(%arg0: i32, %arg1: i32, %arg2: i32) -> (i32, i32, i32) {
    %c0_i32 = arith.constant 0 : i32
    %c0_i32_0 = arith.constant 0 : i32
    %c0_i32_1 = arith.constant 0 : i32
    %c0_i32_2 = arith.constant 0 : i32
    return %c0_i32, %c0_i32_0, %c0_i32_1 : i32, i32, i32
  }
  func.func @transform_4(%arg0: i32, %arg1: i32, %arg2: i32) -> (i32, i32, i32) {
    %c0_i32 = arith.constant 0 : i32
    %c0_i32_0 = arith.constant 0 : i32
    %c0_i32_1 = arith.constant 0 : i32
    %c0_i32_2 = arith.constant 0 : i32
    return %c0_i32, %c0_i32_0, %c0_i32_1 : i32, i32, i32
  }
  func.func @transform_5(%arg0: i32, %arg1: i32, %arg2: i32) -> (i32, i32, i32) {
    %c0_i32 = arith.constant 0 : i32
    %c0_i32_0 = arith.constant 0 : i32
    %c0_i32_1 = arith.constant 0 : i32
    %c0_i32_2 = arith.constant 0 : i32
    return %c0_i32, %c0_i32_0, %c0_i32_1 : i32, i32, i32
  }
  func.func @transform_6(%arg0: i32, %arg1: i32, %arg2: i32) -> (i32, i32) {
    %c0_i32 = arith.constant 0 : i32
    %c0_i32_0 = arith.constant 0 : i32
    %c0_i32_1 = arith.constant 0 : i32
    return %c0_i32, %c0_i32_0 : i32, i32
  }
  func.func @transform_7(%arg0: i32, %arg1: i32, %arg2: i32) -> (i32, i32, i32) {
    %c0_i32 = arith.constant 0 : i32
    %c0_i32_0 = arith.constant 0 : i32
    return %arg0, %arg1, %c0_i32 : i32, i32, i32
  }
}

</mosaic_0001>

<llo_original>
// kernel: tpu_custom_call.1
$region0: #{tpu_custom_call.1}
  #allocation0 [shape = 'u32[]', space=smem, size = 0x4, offset = 0x4, fixed_abs, tag = 'smem constant byte address 0x4 - core index']
  #allocation1 [shape = 'u32[144,128]{1,0:T(1,128)}', space=vmem, size = 0x12000, scoped, tag = 'internal scratch']
  #allocation2 [shape = 'f32[8,32]{1,0:T(8,128)}', space=vmem, size = 0x1000, scoped, tag = 'scratch operand']
  %s0 = inlined_call_operand.hbm [shape: bf16[2,8,32], index: 0, kind: input, shape index: {}]
  %s1 = inlined_call_operand.vmem [shape: bf16[2,4,8,8], index: 1, kind: input, shape index: {}]
  %s2 = inlined_call_operand.vmem [shape: bf16[2,4,8,8], index: 2, kind: input, shape index: {}]
  %s3 = inlined_call_operand.vmem [shape: bf16[4,32,8], index: 3, kind: input, shape index: {}]
  %s4 = inlined_call_operand.vmem [shape: f32[4,1,8], index: 4, kind: input, shape index: {}]
  %s5 = inlined_call_operand.vmem [shape: bf16[4,8,32], index: 5, kind: input, shape index: {}]
  %s6 = inlined_call_operand.vmem [shape: f32[1,32], index: 6, kind: input, shape index: {}]
  %s7 = inlined_call_operand.hbm [shape: f32[2,8,32], index: 7, kind: output, shape index: {}]
  %s8 = sld [smem:[#allocation0]]
  $region73: #{tpu_custom_call.1} parent=0
    _
  %s10 = ssub.s32 1, %s8
  %s11 = scalar_select 0, %s10, %s8
  $region1: #{tpu_custom_call.1} parent=0
    #allocation3 [shape = 'u8[4096]{0}', space=vmem, size = 0x1000, scoped, tag = 'input window, operand 0']
    #allocation4 [shape = 's32[2]{0}', space=sflag, size = 0x8, scoped, tag = 'scoped memory for tpu_custom_call.1']
    #allocation5 [shape = 's32[2]{0}', space=sflag, size = 0x8, scoped, tag = 'scoped memory for tpu_custom_call.1']
    #allocation6 [shape = 'u8[8192]{0}', space=vmem, size = 0x2000, scoped, tag = 'output window, operand 0']
    %12 = vsyncpa [#allocation4], 0
    %s13 = scalar_lea.sflag [#allocation4], 1
    %14 = vsyncpa %s13, 0
    %15 = vsyncpa [#allocation5], 0
    %s16 = scalar_lea.sflag [#allocation5], 1
    %17 = vsyncpa %s16, 0
    loop: start=0, step=1, limit=4
    $region2: #{tpu_custom_call.1} parent=1 // loop_pre_header
      _
    $region3: #{tpu_custom_call.1} parent=1 // loop_header
      %s19 = sphi 0, %s23
      %p20 = scmp.ge.s32.totalorder %s19, 4
      %s26 = sphi 0, %s45
      %s27 = sphi 0, %s41
      %s28 = sphi 0, %s37
      %s29 = sphi 0, %s26
      %s30 = sphi 0, %s27
      %s31 = sphi 0, %s28
      %s32 = sphi 0, %s29
      %s33 = sphi 0, %s30
      %s34 = sphi 0, %s31
      %s50 = sphi 0, %s52
      %s53 = sphi 0, %s50
      %s54 = sphi 0, %s53
      %s70 = sphi 0, %s54
      %s78 = sphi 0, %s80
      %s81 = sphi 0, %s78
      %s82 = sphi 0, %s81
      %s98 = sphi 0, %s82
      %s106 = sphi 0, %s108
      %s109 = sphi 0, %s106
      %s110 = sphi 0, %s109
      %s126 = sphi 0, %s110
      %s130 = sphi 0, %s130
      %s132 = sphi 0, %s130
      %s133 = sphi 0, %s132
      %s147 = sphi 0, %s133
      %s151 = sphi 0, %s151
      %s153 = sphi 0, %s151
      %s154 = sphi 0, %s153
      %s168 = sphi 0, %s154
      %s172 = sphi 0, %s172
      %s174 = sphi 0, %s172
      %s175 = sphi 0, %s174
      %s189 = sphi 0, %s175
      %s193 = sphi 0, %s193
      %s195 = sphi 0, %s193
      %s196 = sphi 0, %s195
      %s210 = sphi 0, %s196
      %s218 = sphi 0, %s220
      %s221 = sphi 0, %s218
      %s222 = sphi 0, %s221
      %s238 = sphi 0, %s222
    $region4: #{tpu_custom_call.1} parent=1 // loop_header_branch
      %22 = sbr.rel (%p20) target = $region8
    $region5: #{tpu_custom_call.1} parent=1 // loop_body
      %s24 = ssub.s32 %s19, 1
      %s25 = ssub.s32 %s19, 2
      %s35 = sadd.s32 1, %s28
      %p36 = scmp.ge.s32.totalorder %s35, 1
      %s37 = scalar_select %p36, 0, %s35
      %s38 = sadd.s32 1, %s27
      %s39 = scalar_select %p36, %s38, %s27
      %p40 = scmp.ge.s32.totalorder %s39, 1
      %s41 = scalar_select %p40, 0, %s39
      %s42 = sadd.s32 1, %s26
      %s43 = scalar_select %p40, %s42, %s26
      %p44 = scmp.ge.s32.totalorder %s43, 2
      %s45 = scalar_select %p44, 0, %s43
      %s46 = ssub.s32 %s26, %s45
      %s47 = ssub.s32 %s27, %s41
      %s48 = sor.u32 %s46, %s47
      %p49 = scmp.eq.s32.totalorder %s48, 0
      %s51 = sadd.s32 %s50, 1
      %s52 = scalar_select %p49, %s50, %s51
      %p55 = pneg %p49
      %p56 = scmp.eq.s32.totalorder %s19, 1
      %p57 = por %p55, %p56
      %p58 = scmp.ne.s32.totalorder %s50, %s53
      %p59 = scmp.eq.s32.totalorder %s19, 0
      %p60 = por %p58, %p59
      %p61 = scmp.ne.s32.totalorder %s50, %s53
      %p62 = scmp.eq.s32.totalorder %s24, 1
      %p63 = por %p61, %p62
      %p64 = scmp.ne.s32.totalorder %s53, %s54
      %p65 = scmp.eq.s32.totalorder %s24, 0
      %p66 = por %p64, %p65
      %p67 = scmp.ne.s32.totalorder %s53, %s54
      %p68 = scmp.eq.s32.totalorder %s25, 1
      %p69 = por %p67, %p68
      %p71 = scmp.ne.s32.totalorder %s54, %s70
      %p72 = scmp.eq.s32.totalorder %s25, 0
      %p73 = por %p71, %p72
      %s74 = ssub.s32 %s26, %s45
      %s75 = ssub.s32 %s28, %s37
      %s76 = sor.u32 %s74, %s75
      %p77 = scmp.eq.s32.totalorder %s76, 0
      %s79 = sadd.s32 %s78, 1
      %s80 = scalar_select %p77, %s78, %s79
      %p83 = pneg %p77
      %p84 = scmp.eq.s32.totalorder %s19, 1
      %p85 = por %p83, %p84
      %p86 = scmp.ne.s32.totalorder %s78, %s81
      %p87 = scmp.eq.s32.totalorder %s19, 0
      %p88 = por %p86, %p87
      %p89 = scmp.ne.s32.totalorder %s78, %s81
      %p90 = scmp.eq.s32.totalorder %s24, 1
      %p91 = por %p89, %p90
      %p92 = scmp.ne.s32.totalorder %s81, %s82
      %p93 = scmp.eq.s32.totalorder %s24, 0
      %p94 = por %p92, %p93
      %p95 = scmp.ne.s32.totalorder %s81, %s82
      %p96 = scmp.eq.s32.totalorder %s25, 1
      %p97 = por %p95, %p96
      %p99 = scmp.ne.s32.totalorder %s82, %s98
      %p100 = scmp.eq.s32.totalorder %s25, 0
      %p101 = por %p99, %p100
      %s102 = ssub.s32 %s26, %s45
      %s103 = ssub.s32 %s28, %s37
      %s104 = sor.u32 %s102, %s103
      %p105 = scmp.eq.s32.totalorder %s104, 0
      %s107 = sadd.s32 %s106, 1
      %s108 = scalar_select %p105, %s106, %s107
      %p111 = pneg %p105
      %p112 = scmp.eq.s32.totalorder %s19, 1
      %p113 = por %p111, %p112
      %p114 = scmp.ne.s32.totalorder %s106, %s109
      %p115 = scmp.eq.s32.totalorder %s19, 0
      %p116 = por %p114, %p115
      %p117 = scmp.ne.s32.totalorder %s106, %s109
      %p118 = scmp.eq.s32.totalorder %s24, 1
      %p119 = por %p117, %p118
      %p120 = scmp.ne.s32.totalorder %s109, %s110
      %p121 = scmp.eq.s32.totalorder %s24, 0
      %p122 = por %p120, %p121
      %p123 = scmp.ne.s32.totalorder %s109, %s110
      %p124 = scmp.eq.s32.totalorder %s25, 1
      %p125 = por %p123, %p124
      %p127 = scmp.ne.s32.totalorder %s110, %s126
      %p128 = scmp.eq.s32.totalorder %s25, 0
      %p129 = por %p127, %p128
      %s131 = sadd.s32 %s130, 1
      %p134 = scmp.eq.s32.totalorder %s19, 1
      %p135 = scmp.ne.s32.totalorder %s130, %s132
      %p136 = scmp.eq.s32.totalorder %s19, 0
      %p137 = por %p135, %p136
      %p138 = scmp.ne.s32.totalorder %s130, %s132
      %p139 = scmp.eq.s32.totalorder %s24, 1
      %p140 = por %p138, %p139
      %p141 = scmp.ne.s32.totalorder %s132, %s133
      %p142 = scmp.eq.s32.totalorder %s24, 0
      %p143 = por %p141, %p142
      %p144 = scmp.ne.s32.totalorder %s132, %s133
      %p145 = scmp.eq.s32.totalorder %s25, 1
      %p146 = por %p144, %p145
      %p148 = scmp.ne.s32.totalorder %s133, %s147
      %p149 = scmp.eq.s32.totalorder %s25, 0
      %p150 = por %p148, %p149
      %s152 = sadd.s32 %s151, 1
      %p155 = scmp.eq.s32.totalorder %s19, 1
      %p156 = scmp.ne.s32.totalorder %s151, %s153
      %p157 = scmp.eq.s32.totalorder %s19, 0
      %p158 = por %p156, %p157
      %p159 = scmp.ne.s32.totalorder %s151, %s153
      %p160 = scmp.eq.s32.totalorder %s24, 1
      %p161 = por %p159, %p160
      %p162 = scmp.ne.s32.totalorder %s153, %s154
      %p163 = scmp.eq.s32.totalorder %s24, 0
      %p164 = por %p162, %p163
      %p165 = scmp.ne.s32.totalorder %s153, %s154
      %p166 = scmp.eq.s32.totalorder %s25, 1
      %p167 = por %p165, %p166
      %p169 = scmp.ne.s32.totalorder %s154, %s168
      %p170 = scmp.eq.s32.totalorder %s25, 0
      %p171 = por %p169, %p170
      %s173 = sadd.s32 %s172, 1
      %p176 = scmp.eq.s32.totalorder %s19, 1
      %p177 = scmp.ne.s32.totalorder %s172, %s174
      %p178 = scmp.eq.s32.totalorder %s19, 0
      %p179 = por %p177, %p178
      %p180 = scmp.ne.s32.totalorder %s172, %s174
      %p181 = scmp.eq.s32.totalorder %s24, 1
      %p182 = por %p180, %p181
      %p183 = scmp.ne.s32.totalorder %s174, %s175
      %p184 = scmp.eq.s32.totalorder %s24, 0
      %p185 = por %p183, %p184
      %p186 = scmp.ne.s32.totalorder %s174, %s175
      %p187 = scmp.eq.s32.totalorder %s25, 1
      %p188 = por %p186, %p187
      %p190 = scmp.ne.s32.totalorder %s175, %s189
      %p191 = scmp.eq.s32.totalorder %s25, 0
      %p192 = por %p190, %p191
      %s194 = sadd.s32 %s193, 1
      %p197 = scmp.eq.s32.totalorder %s19, 1
      %p198 = scmp.ne.s32.totalorder %s193, %s195
      %p199 = scmp.eq.s32.totalorder %s19, 0
      %p200 = por %p198, %p199
      %p201 = scmp.ne.s32.totalorder %s193, %s195
      %p202 = scmp.eq.s32.totalorder %s24, 1
      %p203 = por %p201, %p202
      %p204 = scmp.ne.s32.totalorder %s195, %s196
      %p205 = scmp.eq.s32.totalorder %s24, 0
      %p206 = por %p204, %p205
      %p207 = scmp.ne.s32.totalorder %s195, %s196
      %p208 = scmp.eq.s32.totalorder %s25, 1
      %p209 = por %p207, %p208
      %p211 = scmp.ne.s32.totalorder %s196, %s210
      %p212 = scmp.eq.s32.totalorder %s25, 0
      %p213 = por %p211, %p212
      %s214 = ssub.s32 %s26, %s45
      %s215 = ssub.s32 %s27, %s41
      %s216 = sor.u32 %s214, %s215
      %p217 = scmp.eq.s32.totalorder %s216, 0
      %s219 = sadd.s32 %s218, 1
      %s220 = scalar_select %p217, %s218, %s219
      %p223 = pneg %p217
      %p224 = scmp.eq.s32.totalorder %s19, 1
      %p225 = por %p223, %p224
      %p226 = scmp.ne.s32.totalorder %s218, %s221
      %p227 = scmp.eq.s32.totalorder %s19, 0
      %p228 = por %p226, %p227
      %p229 = scmp.ne.s32.totalorder %s218, %s221
      %p230 = scmp.eq.s32.totalorder %s24, 1
      %p231 = por %p229, %p230
      %p232 = scmp.ne.s32.totalorder %s221, %s222
      %p233 = scmp.eq.s32.totalorder %s24, 0
      %p234 = por %p232, %p233
      %p235 = scmp.ne.s32.totalorder %s221, %s222
      %p236 = scmp.eq.s32.totalorder %s25, 1
      %p237 = por %p235, %p236
      %p239 = scmp.ne.s32.totalorder %s222, %s238
      %p240 = scmp.eq.s32.totalorder %s25, 0
      %p241 = por %p239, %p240
      %p242 = scmp.le.s32.totalorder 1, %s19
      %p243 = scmp.lt.s32.totalorder %s19, 3
      %p244 = pnand %p242, %p243
      %p245 = pneg %p244
      // Predicated region
      $region9: #{tpu_custom_call.1} parent=5 // pred_check
        _
      $region10: #{tpu_custom_call.1} parent=5 // pred_check_branch
        %247 = sbr.rel (%p244) target = $region12
      $region11: #{tpu_custom_call.1} parent=5 // pred_region
        %s248 = ssub.s32 %s19, 1
        // Predicated region
        $region13: #{tpu_custom_call.1} parent=11 // pred_check
          %p249 = pneg %p143
        $region14: #{tpu_custom_call.1} parent=11 // pred_check_branch
          %251 = sbr.rel (%p249) target = $region16
        $region15: #{tpu_custom_call.1} parent=11 // pred_region
          _
        $region16: #{tpu_custom_call.1} parent=11 // pred_fallthru
          _
        // Predicated region
        $region17: #{tpu_custom_call.1} parent=11 // pred_check
          %p252 = pneg %p164
        $region18: #{tpu_custom_call.1} parent=11 // pred_check_branch
          %254 = sbr.rel (%p252) target = $region20
        $region19: #{tpu_custom_call.1} parent=11 // pred_region
          _
        $region20: #{tpu_custom_call.1} parent=11 // pred_fallthru
          _
        // Predicated region
        $region21: #{tpu_custom_call.1} parent=11 // pred_check
          %p255 = pneg %p185
        $region22: #{tpu_custom_call.1} parent=11 // pred_check_branch
          %257 = sbr.rel (%p255) target = $region24
        $region23: #{tpu_custom_call.1} parent=11 // pred_region
          _
        $region24: #{tpu_custom_call.1} parent=11 // pred_fallthru
          _
        // Predicated region
        $region25: #{tpu_custom_call.1} parent=11 // pred_check
          %p258 = pneg %p206
        $region26: #{tpu_custom_call.1} parent=11 // pred_check_branch
          %260 = sbr.rel (%p258) target = $region28
        $region27: #{tpu_custom_call.1} parent=11 // pred_region
          _
        $region28: #{tpu_custom_call.1} parent=11 // pred_fallthru
          _
      $region12: #{tpu_custom_call.1} parent=5 // pred_fallthru
        _
      %p261 = scmp.lt.s32.totalorder %s19, 2
      // Predicated region
      $region29: #{tpu_custom_call.1} parent=5 // pred_check
        %p262 = pneg %p261
      $region30: #{tpu_custom_call.1} parent=5 // pred_check_branch
        %264 = sbr.rel (%p262) target = $region32
      $region31: #{tpu_custom_call.1} parent=5 // pred_region
        // Predicated region
        $region33: #{tpu_custom_call.1} parent=31 // pred_check
          %p265 = pneg %p60
        $region34: #{tpu_custom_call.1} parent=31 // pred_check_branch
          %267 = sbr.rel (%p265) target = $region36
        $region35: #{tpu_custom_call.1} parent=31 // pred_region
          %s268 = sand.u32 %s50, 1
          %s269 = scalar_lea.sflag [#allocation4], %s268
          %s270 = sand.u32 %s50, 1
          %s271 = smul.addr %s270, 4
          %s272 = scalar_lea.vmem [#allocation3], %s271
          %s274 = ssub.s32 64, 64
          %275 = vsyncadd %s269, %s274
          %s276 = sadd.s32 %s27, %s26
          %s277 = smul.addr %s276, 64
          %s278 = scalar_lea.hbm %s0, %s277
          %s280 = sshll.u32 %s272, 4
          %s281 = int_to_ptr.vmem [resolvable:$true] %s280
          %283 = dma.hbm_to_vmem [thread:$0]  %s278, 64, %s281, %s269
        $region36: #{tpu_custom_call.1} parent=31 // pred_fallthru
          _
        // Predicated region
        $region37: #{tpu_custom_call.1} parent=31 // pred_check
          %p284 = pneg %p88
        $region38: #{tpu_custom_call.1} parent=31 // pred_check_branch
          %286 = sbr.rel (%p284) target = $region40
        $region39: #{tpu_custom_call.1} parent=31 // pred_region
          %s287 = smul.u32 4, %s28
          %p288 = scmp.lt.s32.totalorder %s26, 1
          %s289 = scalar_select %p288, %s26, 1
          %p290 = scmp.lt.s32.totalorder %s287, 3
          %s291 = scalar_select %p290, %s287, 3
          %s292 = smul.addr %s289, 4
          %s293 = sadd.s32 %s291, %s292
          %s294 = smul.addr %s293, 4
          %s295 = scalar_lea.vmem %s1, %s294
          %s296 = smul.u32 4, %s28
        $region40: #{tpu_custom_call.1} parent=31 // pred_fallthru
          _
        // Predicated region
        $region41: #{tpu_custom_call.1} parent=31 // pred_check
          %p297 = pneg %p116
        $region42: #{tpu_custom_call.1} parent=31 // pred_check_branch
          %299 = sbr.rel (%p297) target = $region44
        $region43: #{tpu_custom_call.1} parent=31 // pred_region
          %s300 = smul.u32 4, %s28
          %p301 = scmp.lt.s32.totalorder %s26, 1
          %s302 = scalar_select %p301, %s26, 1
          %p303 = scmp.lt.s32.totalorder %s300, 3
          %s304 = scalar_select %p303, %s300, 3
          %s305 = smul.addr %s302, 4
          %s306 = sadd.s32 %s304, %s305
          %s307 = smul.addr %s306, 4
          %s308 = scalar_lea.vmem %s2, %s307
          %s309 = smul.u32 4, %s28
        $region44: #{tpu_custom_call.1} parent=31 // pred_fallthru
          _
      $region32: #{tpu_custom_call.1} parent=5 // pred_fallthru
        _
      %p310 = scmp.le.s32.totalorder 1, %s19
      %p311 = scmp.lt.s32.totalorder %s19, 3
      %p312 = pnand %p310, %p311
      %p313 = pneg %p312
      // Predicated region
      $region45: #{tpu_custom_call.1} parent=5 // pred_check
        _
      $region46: #{tpu_custom_call.1} parent=5 // pred_check_branch
        %315 = sbr.rel (%p312) target = $region48
      $region47: #{tpu_custom_call.1} parent=5 // pred_region
        %s316 = ssub.s32 %s19, 1
        %s317 = sand.u32 %s53, 1
        %s318 = scalar_lea.sflag [#allocation4], %s317
        %s319 = sand.u32 %s53, 1
        %s320 = smul.addr %s319, 4
        %s321 = scalar_lea.vmem [#allocation3], %s320
        // Predicated region
        $region49: #{tpu_custom_call.1} parent=47 // pred_check
          %p322 = pneg %p66
        $region50: #{tpu_custom_call.1} parent=47 // pred_check_branch
          %324 = sbr.rel (%p322) target = $region52
        $region51: #{tpu_custom_call.1} parent=47 // pred_region
          %325 = dma.done %s318, 64
        $region52: #{tpu_custom_call.1} parent=47 // pred_fallthru
          _
        %s326 = sand.u32 %s53, 1
        %s327 = scalar_lea.sflag [#allocation4], %s326
        %s328 = sand.u32 %s53, 1
        %s329 = smul.addr %s328, 4
        %s330 = scalar_lea.vmem [#allocation3], %s329
        %p331 = pneg %p66
        %p332 = pneg %p63
        %s333 = smul.u32 4, %s31
        %p334 = scmp.lt.s32.totalorder %s29, 1
        %s335 = scalar_select %p334, %s29, 1
        %p336 = scmp.lt.s32.totalorder %s333, 3
        %s337 = scalar_select %p336, %s333, 3
        %s338 = smul.addr %s335, 4
        %s339 = sadd.s32 %s337, %s338
        %s340 = smul.addr %s339, 4
        %s341 = scalar_lea.vmem %s1, %s340
        %p342 = pneg %p94
        %p343 = pneg %p91
        %s344 = smul.u32 4, %s31
        %p345 = scmp.lt.s32.totalorder %s29, 1
        %s346 = scalar_select %p345, %s29, 1
        %p347 = scmp.lt.s32.totalorder %s344, 3
        %s348 = scalar_select %p347, %s344, 3
        %s349 = smul.addr %s346, 4
        %s350 = sadd.s32 %s348, %s349
        %s351 = smul.addr %s350, 4
        %s352 = scalar_lea.vmem %s2, %s351
        %p353 = pneg %p122
        %p354 = pneg %p119
        %p355 = pneg %p143
        %p356 = pneg %p140
        %p357 = pneg %p164
        %p358 = pneg %p161
        %p359 = pneg %p185
        %p360 = pneg %p182
        %p361 = pneg %p206
        %p362 = pneg %p203
        %p363 = pneg %p234
        %p364 = pneg %p231
        %s365 = sand.u32 %s221, 1
        %s366 = scalar_lea.sflag [#allocation5], %s365
        %s367 = sand.u32 %s221, 1
        %s368 = smul.addr %s367, 8
        %s369 = scalar_lea.vmem [#allocation6], %s368
        %s370 = smul.u32 4, %s31
        %p371 = scmp.lt.s32.totalorder %s29, 1
        %s372 = scalar_select %p371, %s29, 1
        %p373 = scmp.lt.s32.totalorder %s370, 3
        %s374 = scalar_select %p373, %s370, 3
        %s375 = smul.addr %s372, 4
        %s376 = sadd.s32 %s374, %s375
        %s377 = smul.addr %s376, 4
        %s378 = scalar_lea.vmem %s1, %s377
        %s379 = smul.u32 4, %s31
        %s380 = smul.u32 4, %s31
        %p381 = scmp.lt.s32.totalorder %s29, 1
        %s382 = scalar_select %p381, %s29, 1
        %p383 = scmp.lt.s32.totalorder %s380, 3
        %s384 = scalar_select %p383, %s380, 3
        %s385 = smul.addr %s382, 4
        %s386 = sadd.s32 %s384, %s385
        %s387 = smul.addr %s386, 4
        %s388 = scalar_lea.vmem %s2, %s387
        %s389 = smul.u32 4, %s31
        %p391 = scmp.eq.s32.totalorder %s31, 0
        // Predicated region
        $region53: #{tpu_custom_call.1} parent=47 // pred_check
          %p392 = pneg %p391
        $region54: #{tpu_custom_call.1} parent=47 // pred_check_branch
          %394 = sbr.rel (%p392) target = $region56
        $region55: #{tpu_custom_call.1} parent=47 // pred_region
          %vm395 = vcmask 261120
          %396 = vst.msk [vmem:[#allocation2] sm:$0xff] %vm395, 0.0
        $region56: #{tpu_custom_call.1} parent=47 // pred_fallthru
          _
        %v397 = vld [vmem:[%s321] sm:$0xf]
        %s398 = smul.u32 %s31, 4
        %s399 = smul.u32 %s398, 4
        %s400 = smul.addr %s399, 4
        %s401 = scalar_lea.vmem %s3, %s400
        %v402 = vld [vmem:[%s401] sm:$0xf]
        %v403 = vld [vmem:[%s401 + $0x4] sm:$0xf]
        %v404 = vld [vmem:[%s401 + $0x8] sm:$0xf]
        %v405 = vld [vmem:[%s401 + $0xc] sm:$0xf]
        %s406 = scalar_lea.vmem %s4, %s398
        %v407 = vld [vmem:[%s406] sm:$0x1]
        %s408 = smul.addr %s398, 4
        %s409 = scalar_lea.vmem %s5, %s408
        %v410 = vld [vmem:[%s409] sm:$0xf]
        %v411 = vld [vmem:[%s378] sm:$0xf]
        %v412 = vld [vmem:[%s388] sm:$0xf]
        %v414 = vlaneseq
        %v415 = vshrl.u32 %v414, 7
        %v416 = vsub.s32 0, %v415
        %v417 = vrot.slane %v407, %v416
        %v423 = vunpack.c.l.b16 %v402
        %v424 = vunpack.c.l.b16 %v403
        %v425 = vunpack.c.l.b16 %v404
        %v426 = vunpack.c.l.b16 %v405
        %v427 = vpack.c.b16 %v424, %v423
        %v428 = vpack.c.b16 %v426, %v425
        %vm431 = vcmask 261120
        %v433 = vsel %vm431, %v397, 0
        %435 = vmatprep.subr.bf16.mxu0 0
        %436 = vmatpush1.bf16.msra.mxu0 %v427
        %437 = vmatprep.subr.bf16.mxu0 0
        %438 = vmatpush1.bf16.msra.mxu0 %v428
        %439 = vmatprep.subr.bf16.mxu0 0
        %440 = vmatpush1.bf16.msra.mxu0 0
        %441 = vmatprep.subr.bf16.mxu0 0
        %442 = vmatpush1.bf16.msra.mxu0 0
        %443 = vmatprep.subr.bf16.mxu0 0
        %444 = vmatpush1.bf16.msra.mxu0 0
        %445 = vmatprep.subr.bf16.mxu0 0
        %446 = vmatpush1.bf16.msra.mxu0 0
        %447 = vmatprep.subr.bf16.mxu0 0
        %448 = vmatpush1.bf16.msra.mxu0 0
        %449 = vmatprep.subr.bf16.mxu0 0
        %450 = vmatpush1.bf16.msra.mxu0 0
        %451 = vmatprep.subr.bf16.mxu0 0
        %452 = vmatpush1.bf16.msra.mxu0 0
        %453 = vmatprep.subr.bf16.mxu0 0
        %454 = vmatpush1.bf16.msra.mxu0 0
        %455 = vmatprep.subr.bf16.mxu0 0
        %456 = vmatpush1.bf16.msra.mxu0 0
        %457 = vmatprep.subr.bf16.mxu0 0
        %458 = vmatpush1.bf16.msra.mxu0 0
        %459 = vmatprep.subr.bf16.mxu0 0
        %460 = vmatpush1.bf16.msra.mxu0 0
        %461 = vmatprep.subr.bf16.mxu0 0
        %462 = vmatpush1.bf16.msra.mxu0 0
        %463 = vmatprep.subr.bf16.mxu0 0
        %464 = vmatpush1.bf16.msra.mxu0 0
        %465 = vmatprep.subr.bf16.mxu0 0
        %466 = vmatpush1.bf16.msra.mxu0 0
        %467 = vmatprep.mubr.bf16.mxu0 0
        %468 = vmatmul.mubr.bf16.gmra.mrb[0].mxu0 %v433
        %v469 = vpop.f32.mrb[0].mxu0
        %v470 = vadd.f32 %v417, %v469
        %v471 = vpop.f32.mrb[0].mxu0
        %v472 = vpop.f32.mrb[0].mxu0
        %v473 = vpop.f32.mrb[0].mxu0
        %474 = vdwg.mxu0
        %v475 = vpack.c.bf16 %v470, %v470
        %vm476 = vcmask 64512
        %v478 = vsel %vm476, %v475, 0
        %v481 = vsel %vm476, %v411, 0
        %483 = vmatprep.subr.bf16.mxu0 0
        %484 = vmatpush1.bf16.xpose.msra.mxu0 %v481
        %485 = vmatprep.subr.bf16.mxu0 0
        %486 = vmatpush1.bf16.xpose.msra.mxu0 0
        %487 = vmatprep.subr.bf16.mxu0 0
        %488 = vmatpush1.bf16.xpose.msra.mxu0 0
        %489 = vmatprep.subr.bf16.mxu0 0
        %490 = vmatpush1.bf16.xpose.msra.mxu0 0
        %491 = vmatprep.subr.bf16.mxu0 0
        %492 = vmatpush1.bf16.xpose.msra.mxu0 0
        %493 = vmatprep.subr.bf16.mxu0 0
        %494 = vmatpush1.bf16.xpose.msra.mxu0 0
        %495 = vmatprep.subr.bf16.mxu0 0
        %496 = vmatpush1.bf16.xpose.msra.mxu0 0
        %497 = vmatprep.subr.bf16.mxu0 0
        %498 = vmatpush1.bf16.xpose.msra.mxu0 0
        %499 = vmatprep.subr.bf16.mxu0 0
        %500 = vmatpush1.bf16.xpose.msra.mxu0 0
        %501 = vmatprep.subr.bf16.mxu0 0
        %502 = vmatpush1.bf16.xpose.msra.mxu0 0
        %503 = vmatprep.subr.bf16.mxu0 0
        %504 = vmatpush1.bf16.xpose.msra.mxu0 0
        %505 = vmatprep.subr.bf16.mxu0 0
        %506 = vmatpush1.bf16.xpose.msra.mxu0 0
        %507 = vmatprep.subr.bf16.mxu0 0
        %508 = vmatpush1.bf16.xpose.msra.mxu0 0
        %509 = vmatprep.subr.bf16.mxu0 0
        %510 = vmatpush1.bf16.xpose.msra.mxu0 0
        %511 = vmatprep.subr.bf16.mxu0 0
        %512 = vmatpush1.bf16.xpose.msra.mxu0 0
        %513 = vmatprep.subr.bf16.mxu0 0
        %514 = vmatpush1.bf16.xpose.msra.mxu0 0
        %515 = vmatprep.mubr.bf16.mxu0 0
        %516 = vmatmul.mubr.bf16.gmra.mrb[0].mxu0 %v478
        %v517 = vpop.f32.mrb[0].mxu0
        %v518 = vadd.f32 0.0, %v517
        %v519 = vpop.f32.mrb[0].mxu0
        %v520 = vpop.f32.mrb[0].mxu0
        %v521 = vpop.f32.mrb[0].mxu0
        %522 = vdwg.mxu0
        %v523 = vsel %vm476, %v518, -inf
        %524 = vmax.xlane.f32.xlu0 %v523
        %v525 = vpop.xlane.xlu0 %524
        %v526 = vsub.f32 %v518, %v525
        %v527 = vmul.f32 %v526, 1.442695
        %v528 = vpow.pop %v527
        %v529 = vsel %vm476, %v528, 0.0
        %530 = vadd.xlane.f32.xlu0 %v529
        %v531 = vpop.xlane.xlu0 %530
        %v532 = vrcp.pop %v531
        %v533 = vmul.f32 %v528, %v532
        %v534 = vpack.c.bf16 %v533, %v533
        %v536 = vsel %vm476, %v534, 0
        %vm538 = vcmask 1043456
        %v540 = vsel %vm538, %v412, 0
        %542 = vmatprep.subr.bf16.mxu0 0
        %543 = vmatpush1.bf16.msra.mxu0 %v540
        %544 = vmatprep.subr.bf16.mxu0 0
        %545 = vmatpush1.bf16.msra.mxu0 0
        %546 = vmatprep.subr.bf16.mxu0 0
        %547 = vmatpush1.bf16.msra.mxu0 0
        %548 = vmatprep.subr.bf16.mxu0 0
        %549 = vmatpush1.bf16.msra.mxu0 0
        %550 = vmatprep.subr.bf16.mxu0 0
        %551 = vmatpush1.bf16.msra.mxu0 0
        %552 = vmatprep.subr.bf16.mxu0 0
        %553 = vmatpush1.bf16.msra.mxu0 0
        %554 = vmatprep.subr.bf16.mxu0 0
        %555 = vmatpush1.bf16.msra.mxu0 0
        %556 = vmatprep.subr.bf16.mxu0 0
        %557 = vmatpush1.bf16.msra.mxu0 0
        %558 = vmatprep.subr.bf16.mxu0 0
        %559 = vmatpush1.bf16.msra.mxu0 0
        %560 = vmatprep.subr.bf16.mxu0 0
        %561 = vmatpush1.bf16.msra.mxu0 0
        %562 = vmatprep.subr.bf16.mxu0 0
        %563 = vmatpush1.bf16.msra.mxu0 0
        %564 = vmatprep.subr.bf16.mxu0 0
        %565 = vmatpush1.bf16.msra.mxu0 0
        %566 = vmatprep.subr.bf16.mxu0 0
        %567 = vmatpush1.bf16.msra.mxu0 0
        %568 = vmatprep.subr.bf16.mxu0 0
        %569 = vmatpush1.bf16.msra.mxu0 0
        %570 = vmatprep.subr.bf16.mxu0 0
        %571 = vmatpush1.bf16.msra.mxu0 0
        %572 = vmatprep.subr.bf16.mxu0 0
        %573 = vmatpush1.bf16.msra.mxu0 0
        %574 = vmatprep.mubr.bf16.mxu0 0
        %575 = vmatmul.mubr.bf16.gmra.mrb[0].mxu0 %v536
        %v576 = vpop.f32.mrb[0].mxu0
        %v577 = vadd.f32 0.0, %v576
        %v578 = vpop.f32.mrb[0].mxu0
        %v579 = vpop.f32.mrb[0].mxu0
        %v580 = vpop.f32.mrb[0].mxu0
        %581 = vdwg.mxu0
        %v582 = vld [vmem:[#allocation2] sm:$0xff]
        %v583 = vpack.c.bf16 %v577, %v577
        %v585 = vsel %vm476, %v583, 0
        %v588 = vsel %vm538, %v410, 0
        %590 = vmatprep.subr.bf16.mxu0 0
        %591 = vmatpush1.bf16.msra.mxu0 %v588
        %592 = vmatprep.subr.bf16.mxu0 0
        %593 = vmatpush1.bf16.msra.mxu0 0
        %594 = vmatprep.subr.bf16.mxu0 0
        %595 = vmatpush1.bf16.msra.mxu0 0
        %596 = vmatprep.subr.bf16.mxu0 0
        %597 = vmatpush1.bf16.msra.mxu0 0
        %598 = vmatprep.subr.bf16.mxu0 0
        %599 = vmatpush1.bf16.msra.mxu0 0
        %600 = vmatprep.subr.bf16.mxu0 0
        %601 = vmatpush1.bf16.msra.mxu0 0
        %602 = vmatprep.subr.bf16.mxu0 0
        %603 = vmatpush1.bf16.msra.mxu0 0
        %604 = vmatprep.subr.bf16.mxu0 0
        %605 = vmatpush1.bf16.msra.mxu0 0
        %606 = vmatprep.subr.bf16.mxu0 0
        %607 = vmatpush1.bf16.msra.mxu0 0
        %608 = vmatprep.subr.bf16.mxu0 0
        %609 = vmatpush1.bf16.msra.mxu0 0
        %610 = vmatprep.subr.bf16.mxu0 0
        %611 = vmatpush1.bf16.msra.mxu0 0
        %612 = vmatprep.subr.bf16.mxu0 0
        %613 = vmatpush1.bf16.msra.mxu0 0
        %614 = vmatprep.subr.bf16.mxu0 0
        %615 = vmatpush1.bf16.msra.mxu0 0
        %616 = vmatprep.subr.bf16.mxu0 0
        %617 = vmatpush1.bf16.msra.mxu0 0
        %618 = vmatprep.subr.bf16.mxu0 0
        %619 = vmatpush1.bf16.msra.mxu0 0
        %620 = vmatprep.subr.bf16.mxu0 0
        %621 = vmatpush1.bf16.msra.mxu0 0
        %622 = vmatprep.mubr.bf16.mxu0 0
        %623 = vmatmul.mubr.bf16.gmra.mrb[0].mxu0 %v585
        %v624 = vpop.f32.mrb[0].mxu0
        %v625 = vadd.f32 0.0, %v624
        %v626 = vpop.f32.mrb[0].mxu0
        %v627 = vpop.f32.mrb[0].mxu0
        %v628 = vpop.f32.mrb[0].mxu0
        %629 = vdwg.mxu0
        %v630 = vadd.f32 %v582, %v625
        %631 = vst.msk [vmem:[#allocation2] sm:$0xff] %vm431, %v630
        %s632 = sadd.s32 %s398, 1
        %s633 = smul.u32 %s632, 4
        %s634 = smul.addr %s633, 4
        %s635 = scalar_lea.vmem %s3, %s634
        %v636 = vld [vmem:[%s635] sm:$0xf]
        %v637 = vld [vmem:[%s635 + $0x4] sm:$0xf]
        %v638 = vld [vmem:[%s635 + $0x8] sm:$0xf]
        %v639 = vld [vmem:[%s635 + $0xc] sm:$0xf]
        %s640 = scalar_lea.vmem %s4, %s632
        %v641 = vld [vmem:[%s640] sm:$0x1]
        %s642 = smul.addr %s632, 4
        %s643 = scalar_lea.vmem %s5, %s642
        %v644 = vld [vmem:[%s643] sm:$0xf]
        %s645 = scalar_lea.vmem %s378, 4
        %v646 = vld [vmem:[%s645] sm:$0xf]
        %s647 = scalar_lea.vmem %s388, 4
        %v648 = vld [vmem:[%s647] sm:$0xf]
        %v650 = vlaneseq
        %v651 = vshrl.u32 %v650, 7
        %v652 = vsub.s32 0, %v651
        %v653 = vrot.slane %v641, %v652
        %v659 = vunpack.c.l.b16 %v636
        %v660 = vunpack.c.l.b16 %v637
        %v661 = vunpack.c.l.b16 %v638
        %v662 = vunpack.c.l.b16 %v639
        %v663 = vpack.c.b16 %v660, %v659
        %v664 = vpack.c.b16 %v662, %v661
        %667 = vmatprep.subr.bf16.mxu0 0
        %668 = vmatpush1.bf16.msra.mxu0 %v663
        %669 = vmatprep.subr.bf16.mxu0 0
        %670 = vmatpush1.bf16.msra.mxu0 %v664
        %671 = vmatprep.subr.bf16.mxu0 0
        %672 = vmatpush1.bf16.msra.mxu0 0
        %673 = vmatprep.subr.bf16.mxu0 0
        %674 = vmatpush1.bf16.msra.mxu0 0
        %675 = vmatprep.subr.bf16.mxu0 0
        %676 = vmatpush1.bf16.msra.mxu0 0
        %677 = vmatprep.subr.bf16.mxu0 0
        %678 = vmatpush1.bf16.msra.mxu0 0
        %679 = vmatprep.subr.bf16.mxu0 0
        %680 = vmatpush1.bf16.msra.mxu0 0
        %681 = vmatprep.subr.bf16.mxu0 0
        %682 = vmatpush1.bf16.msra.mxu0 0
        %683 = vmatprep.subr.bf16.mxu0 0
        %684 = vmatpush1.bf16.msra.mxu0 0
        %685 = vmatprep.subr.bf16.mxu0 0
        %686 = vmatpush1.bf16.msra.mxu0 0
        %687 = vmatprep.subr.bf16.mxu0 0
        %688 = vmatpush1.bf16.msra.mxu0 0
        %689 = vmatprep.subr.bf16.mxu0 0
        %690 = vmatpush1.bf16.msra.mxu0 0
        %691 = vmatprep.subr.bf16.mxu0 0
        %692 = vmatpush1.bf16.msra.mxu0 0
        %693 = vmatprep.subr.bf16.mxu0 0
        %694 = vmatpush1.bf16.msra.mxu0 0
        %695 = vmatprep.subr.bf16.mxu0 0
        %696 = vmatpush1.bf16.msra.mxu0 0
        %697 = vmatprep.subr.bf16.mxu0 0
        %698 = vmatpush1.bf16.msra.mxu0 0
        %699 = vmatprep.mubr.bf16.mxu0 0
        %700 = vmatmul.mubr.bf16.gmra.mrb[0].mxu0 %v433
        %v701 = vpop.f32.mrb[0].mxu0
        %v702 = vadd.f32 %v653, %v701
        %v703 = vpop.f32.mrb[0].mxu0
        %v704 = vpop.f32.mrb[0].mxu0
        %v705 = vpop.f32.mrb[0].mxu0
        %706 = vdwg.mxu0
        %v707 = vpack.c.bf16 %v702, %v702
        %v709 = vsel %vm476, %v707, 0
        %v712 = vsel %vm476, %v646, 0
        %714 = vmatprep.subr.bf16.mxu0 0
        %715 = vmatpush1.bf16.xpose.msra.mxu0 %v712
        %716 = vmatprep.subr.bf16.mxu0 0
        %717 = vmatpush1.bf16.xpose.msra.mxu0 0
        %718 = vmatprep.subr.bf16.mxu0 0
        %719 = vmatpush1.bf16.xpose.msra.mxu0 0
        %720 = vmatprep.subr.bf16.mxu0 0
        %721 = vmatpush1.bf16.xpose.msra.mxu0 0
        %722 = vmatprep.subr.bf16.mxu0 0
        %723 = vmatpush1.bf16.xpose.msra.mxu0 0
        %724 = vmatprep.subr.bf16.mxu0 0
        %725 = vmatpush1.bf16.xpose.msra.mxu0 0
        %726 = vmatprep.subr.bf16.mxu0 0
        %727 = vmatpush1.bf16.xpose.msra.mxu0 0
        %728 = vmatprep.subr.bf16.mxu0 0
        %729 = vmatpush1.bf16.xpose.msra.mxu0 0
        %730 = vmatprep.subr.bf16.mxu0 0
        %731 = vmatpush1.bf16.xpose.msra.mxu0 0
        %732 = vmatprep.subr.bf16.mxu0 0
        %733 = vmatpush1.bf16.xpose.msra.mxu0 0
        %734 = vmatprep.subr.bf16.mxu0 0
        %735 = vmatpush1.bf16.xpose.msra.mxu0 0
        %736 = vmatprep.subr.bf16.mxu0 0
        %737 = vmatpush1.bf16.xpose.msra.mxu0 0
        %738 = vmatprep.subr.bf16.mxu0 0
        %739 = vmatpush1.bf16.xpose.msra.mxu0 0
        %740 = vmatprep.subr.bf16.mxu0 0
        %741 = vmatpush1.bf16.xpose.msra.mxu0 0
        %742 = vmatprep.subr.bf16.mxu0 0
        %743 = vmatpush1.bf16.xpose.msra.mxu0 0
        %744 = vmatprep.subr.bf16.mxu0 0
        %745 = vmatpush1.bf16.xpose.msra.mxu0 0
        %746 = vmatprep.mubr.bf16.mxu0 0
        %747 = vmatmul.mubr.bf16.gmra.mrb[0].mxu0 %v709
        %v748 = vpop.f32.mrb[0].mxu0
        %v749 = vadd.f32 0.0, %v748
        %v750 = vpop.f32.mrb[0].mxu0
        %v751 = vpop.f32.mrb[0].mxu0
        %v752 = vpop.f32.mrb[0].mxu0
        %753 = vdwg.mxu0
        %v754 = vsel %vm476, %v749, -inf
        %755 = vmax.xlane.f32.xlu0 %v754
        %v756 = vpop.xlane.xlu0 %755
        %v757 = vsub.f32 %v749, %v756
        %v758 = vmul.f32 %v757, 1.442695
        %v759 = vpow.pop %v758
        %v760 = vsel %vm476, %v759, 0.0
        %761 = vadd.xlane.f32.xlu0 %v760
        %v762 = vpop.xlane.xlu0 %761
        %v763 = vrcp.pop %v762
        %v764 = vmul.f32 %v759, %v763
        %v765 = vpack.c.bf16 %v764, %v764
        %v767 = vsel %vm476, %v765, 0
        %v770 = vsel %vm538, %v648, 0
        %772 = vmatprep.subr.bf16.mxu0 0
        %773 = vmatpush1.bf16.msra.mxu0 %v770
        %774 = vmatprep.subr.bf16.mxu0 0
        %775 = vmatpush1.bf16.msra.mxu0 0
        %776 = vmatprep.subr.bf16.mxu0 0
        %777 = vmatpush1.bf16.msra.mxu0 0
        %778 = vmatprep.subr.bf16.mxu0 0
        %779 = vmatpush1.bf16.msra.mxu0 0
        %780 = vmatprep.subr.bf16.mxu0 0
        %781 = vmatpush1.bf16.msra.mxu0 0
        %782 = vmatprep.subr.bf16.mxu0 0
        %783 = vmatpush1.bf16.msra.mxu0 0
        %784 = vmatprep.subr.bf16.mxu0 0
        %785 = vmatpush1.bf16.msra.mxu0 0
        %786 = vmatprep.subr.bf16.mxu0 0
        %787 = vmatpush1.bf16.msra.mxu0 0
        %788 = vmatprep.subr.bf16.mxu0 0
        %789 = vmatpush1.bf16.msra.mxu0 0
        %790 = vmatprep.subr.bf16.mxu0 0
        %791 = vmatpush1.bf16.msra.mxu0 0
        %792 = vmatprep.subr.bf16.mxu0 0
        %793 = vmatpush1.bf16.msra.mxu0 0
        %794 = vmatprep.subr.bf16.mxu0 0
        %795 = vmatpush1.bf16.msra.mxu0 0
        %796 = vmatprep.subr.bf16.mxu0 0
        %797 = vmatpush1.bf16.msra.mxu0 0
        %798 = vmatprep.subr.bf16.mxu0 0
        %799 = vmatpush1.bf16.msra.mxu0 0
        %800 = vmatprep.subr.bf16.mxu0 0
        %801 = vmatpush1.bf16.msra.mxu0 0
        %802 = vmatprep.subr.bf16.mxu0 0
        %803 = vmatpush1.bf16.msra.mxu0 0
        %804 = vmatprep.mubr.bf16.mxu0 0
        %805 = vmatmul.mubr.bf16.gmra.mrb[0].mxu0 %v767
        %v806 = vpop.f32.mrb[0].mxu0
        %v807 = vadd.f32 0.0, %v806
        %v808 = vpop.f32.mrb[0].mxu0
        %v809 = vpop.f32.mrb[0].mxu0
        %v810 = vpop.f32.mrb[0].mxu0
        %811 = vdwg.mxu0
        %v812 = vld [vmem:[#allocation2] sm:$0xff]
        %v813 = vpack.c.bf16 %v807, %v807
        %v815 = vsel %vm476, %v813, 0
        %v818 = vsel %vm538, %v644, 0
        %820 = vmatprep.subr.bf16.mxu0 0
        %821 = vmatpush1.bf16.msra.mxu0 %v818
        %822 = vmatprep.subr.bf16.mxu0 0
        %823 = vmatpush1.bf16.msra.mxu0 0
        %824 = vmatprep.subr.bf16.mxu0 0
        %825 = vmatpush1.bf16.msra.mxu0 0
        %826 = vmatprep.subr.bf16.mxu0 0
        %827 = vmatpush1.bf16.msra.mxu0 0
        %828 = vmatprep.subr.bf16.mxu0 0
        %829 = vmatpush1.bf16.msra.mxu0 0
        %830 = vmatprep.subr.bf16.mxu0 0
        %831 = vmatpush1.bf16.msra.mxu0 0
        %832 = vmatprep.subr.bf16.mxu0 0
        %833 = vmatpush1.bf16.msra.mxu0 0
        %834 = vmatprep.subr.bf16.mxu0 0
        %835 = vmatpush1.bf16.msra.mxu0 0
        %836 = vmatprep.subr.bf16.mxu0 0
        %837 = vmatpush1.bf16.msra.mxu0 0
        %838 = vmatprep.subr.bf16.mxu0 0
        %839 = vmatpush1.bf16.msra.mxu0 0
        %840 = vmatprep.subr.bf16.mxu0 0
        %841 = vmatpush1.bf16.msra.mxu0 0
        %842 = vmatprep.subr.bf16.mxu0 0
        %843 = vmatpush1.bf16.msra.mxu0 0
        %844 = vmatprep.subr.bf16.mxu0 0
        %845 = vmatpush1.bf16.msra.mxu0 0
        %846 = vmatprep.subr.bf16.mxu0 0
        %847 = vmatpush1.bf16.msra.mxu0 0
        %848 = vmatprep.subr.bf16.mxu0 0
        %849 = vmatpush1.bf16.msra.mxu0 0
        %850 = vmatprep.subr.bf16.mxu0 0
        %851 = vmatpush1.bf16.msra.mxu0 0
        %852 = vmatprep.mubr.bf16.mxu0 0
        %853 = vmatmul.mubr.bf16.gmra.mrb[0].mxu0 %v815
        %v854 = vpop.f32.mrb[0].mxu0
        %v855 = vadd.f32 0.0, %v854
        %v856 = vpop.f32.mrb[0].mxu0
        %v857 = vpop.f32.mrb[0].mxu0
        %v858 = vpop.f32.mrb[0].mxu0
        %859 = vdwg.mxu0
        %v860 = vadd.f32 %v812, %v855
        %861 = vst.msk [vmem:[#allocation2] sm:$0xff] %vm431, %v860
        %s862 = sadd.s32 %s398, 2
        %s863 = smul.u32 %s862, 4
        %s864 = smul.addr %s863, 4
        %s865 = scalar_lea.vmem %s3, %s864
        %v866 = vld [vmem:[%s865] sm:$0xf]
        %v867 = vld [vmem:[%s865 + $0x4] sm:$0xf]
        %v868 = vld [vmem:[%s865 + $0x8] sm:$0xf]
        %v869 = vld [vmem:[%s865 + $0xc] sm:$0xf]
        %s870 = scalar_lea.vmem %s4, %s862
        %v871 = vld [vmem:[%s870] sm:$0x1]
        %s872 = smul.addr %s862, 4
        %s873 = scalar_lea.vmem %s5, %s872
        %v874 = vld [vmem:[%s873] sm:$0xf]
        %s875 = scalar_lea.vmem %s378, 8
        %v876 = vld [vmem:[%s875] sm:$0xf]
        %s877 = scalar_lea.vmem %s388, 8
        %v878 = vld [vmem:[%s877] sm:$0xf]
        %v880 = vlaneseq
        %v881 = vshrl.u32 %v880, 7
        %v882 = vsub.s32 0, %v881
        %v883 = vrot.slane %v871, %v882
        %v889 = vunpack.c.l.b16 %v866
        %v890 = vunpack.c.l.b16 %v867
        %v891 = vunpack.c.l.b16 %v868
        %v892 = vunpack.c.l.b16 %v869
        %v893 = vpack.c.b16 %v890, %v889
        %v894 = vpack.c.b16 %v892, %v891
        %897 = vmatprep.subr.bf16.mxu0 0
        %898 = vmatpush1.bf16.msra.mxu0 %v893
        %899 = vmatprep.subr.bf16.mxu0 0
        %900 = vmatpush1.bf16.msra.mxu0 %v894
        %901 = vmatprep.subr.bf16.mxu0 0
        %902 = vmatpush1.bf16.msra.mxu0 0
        %903 = vmatprep.subr.bf16.mxu0 0
        %904 = vmatpush1.bf16.msra.mxu0 0
        %905 = vmatprep.subr.bf16.mxu0 0
        %906 = vmatpush1.bf16.msra.mxu0 0
        %907 = vmatprep.subr.bf16.mxu0 0
        %908 = vmatpush1.bf16.msra.mxu0 0
        %909 = vmatprep.subr.bf16.mxu0 0
        %910 = vmatpush1.bf16.msra.mxu0 0
        %911 = vmatprep.subr.bf16.mxu0 0
        %912 = vmatpush1.bf16.msra.mxu0 0
        %913 = vmatprep.subr.bf16.mxu0 0
        %914 = vmatpush1.bf16.msra.mxu0 0
        %915 = vmatprep.subr.bf16.mxu0 0
        %916 = vmatpush1.bf16.msra.mxu0 0
        %917 = vmatprep.subr.bf16.mxu0 0
        %918 = vmatpush1.bf16.msra.mxu0 0
        %919 = vmatprep.subr.bf16.mxu0 0
        %920 = vmatpush1.bf16.msra.mxu0 0
        %921 = vmatprep.subr.bf16.mxu0 0
        %922 = vmatpush1.bf16.msra.mxu0 0
        %923 = vmatprep.subr.bf16.mxu0 0
        %924 = vmatpush1.bf16.msra.mxu0 0
        %925 = vmatprep.subr.bf16.mxu0 0
        %926 = vmatpush1.bf16.msra.mxu0 0
        %927 = vmatprep.subr.bf16.mxu0 0
        %928 = vmatpush1.bf16.msra.mxu0 0
        %929 = vmatprep.mubr.bf16.mxu0 0
        %930 = vmatmul.mubr.bf16.gmra.mrb[0].mxu0 %v433
        %v931 = vpop.f32.mrb[0].mxu0
        %v932 = vadd.f32 %v883, %v931
        %v933 = vpop.f32.mrb[0].mxu0
        %v934 = vpop.f32.mrb[0].mxu0
        %v935 = vpop.f32.mrb[0].mxu0
        %936 = vdwg.mxu0
        %v937 = vpack.c.bf16 %v932, %v932
        %v939 = vsel %vm476, %v937, 0
        %v942 = vsel %vm476, %v876, 0
        %944 = vmatprep.subr.bf16.mxu0 0
        %945 = vmatpush1.bf16.xpose.msra.mxu0 %v942
        %946 = vmatprep.subr.bf16.mxu0 0
        %947 = vmatpush1.bf16.xpose.msra.mxu0 0
        %948 = vmatprep.subr.bf16.mxu0 0
        %949 = vmatpush1.bf16.xpose.msra.mxu0 0
        %950 = vmatprep.subr.bf16.mxu0 0
        %951 = vmatpush1.bf16.xpose.msra.mxu0 0
        %952 = vmatprep.subr.bf16.mxu0 0
        %953 = vmatpush1.bf16.xpose.msra.mxu0 0
        %954 = vmatprep.subr.bf16.mxu0 0
        %955 = vmatpush1.bf16.xpose.msra.mxu0 0
        %956 = vmatprep.subr.bf16.mxu0 0
        %957 = vmatpush1.bf16.xpose.msra.mxu0 0
        %958 = vmatprep.subr.bf16.mxu0 0
        %959 = vmatpush1.bf16.xpose.msra.mxu0 0
        %960 = vmatprep.subr.bf16.mxu0 0
        %961 = vmatpush1.bf16.xpose.msra.mxu0 0
        %962 = vmatprep.subr.bf16.mxu0 0
        %963 = vmatpush1.bf16.xpose.msra.mxu0 0
        %964 = vmatprep.subr.bf16.mxu0 0
        %965 = vmatpush1.bf16.xpose.msra.mxu0 0
        %966 = vmatprep.subr.bf16.mxu0 0
        %967 = vmatpush1.bf16.xpose.msra.mxu0 0
        %968 = vmatprep.subr.bf16.mxu0 0
        %969 = vmatpush1.bf16.xpose.msra.mxu0 0
        %970 = vmatprep.subr.bf16.mxu0 0
        %971 = vmatpush1.bf16.xpose.msra.mxu0 0
        %972 = vmatprep.subr.bf16.mxu0 0
        %973 = vmatpush1.bf16.xpose.msra.mxu0 0
        %974 = vmatprep.subr.bf16.mxu0 0
        %975 = vmatpush1.bf16.xpose.msra.mxu0 0
        %976 = vmatprep.mubr.bf16.mxu0 0
        %977 = vmatmul.mubr.bf16.gmra.mrb[0].mxu0 %v939
        %v978 = vpop.f32.mrb[0].mxu0
        %v979 = vadd.f32 0.0, %v978
        %v980 = vpop.f32.mrb[0].mxu0
        %v981 = vpop.f32.mrb[0].mxu0
        %v982 = vpop.f32.mrb[0].mxu0
        %983 = vdwg.mxu0
        %v984 = vsel %vm476, %v979, -inf
        %985 = vmax.xlane.f32.xlu0 %v984
        %v986 = vpop.xlane.xlu0 %985
        %v987 = vsub.f32 %v979, %v986
        %v988 = vmul.f32 %v987, 1.442695
        %v989 = vpow.pop %v988
        %v990 = vsel %vm476, %v989, 0.0
        %991 = vadd.xlane.f32.xlu0 %v990
        %v992 = vpop.xlane.xlu0 %991
        %v993 = vrcp.pop %v992
        %v994 = vmul.f32 %v989, %v993
        %v995 = vpack.c.bf16 %v994, %v994
        %v997 = vsel %vm476, %v995, 0
        %v1000 = vsel %vm538, %v878, 0
        %1002 = vmatprep.subr.bf16.mxu0 0
        %1003 = vmatpush1.bf16.msra.mxu0 %v1000
        %1004 = vmatprep.subr.bf16.mxu0 0
        %1005 = vmatpush1.bf16.msra.mxu0 0
        %1006 = vmatprep.subr.bf16.mxu0 0
        %1007 = vmatpush1.bf16.msra.mxu0 0
        %1008 = vmatprep.subr.bf16.mxu0 0
        %1009 = vmatpush1.bf16.msra.mxu0 0
        %1010 = vmatprep.subr.bf16.mxu0 0
        %1011 = vmatpush1.bf16.msra.mxu0 0
        %1012 = vmatprep.subr.bf16.mxu0 0
        %1013 = vmatpush1.bf16.msra.mxu0 0
        %1014 = vmatprep.subr.bf16.mxu0 0
        %1015 = vmatpush1.bf16.msra.mxu0 0
        %1016 = vmatprep.subr.bf16.mxu0 0
        %1017 = vmatpush1.bf16.msra.mxu0 0
        %1018 = vmatprep.subr.bf16.mxu0 0
        %1019 = vmatpush1.bf16.msra.mxu0 0
        %1020 = vmatprep.subr.bf16.mxu0 0
        %1021 = vmatpush1.bf16.msra.mxu0 0
        %1022 = vmatprep.subr.bf16.mxu0 0
        %1023 = vmatpush1.bf16.msra.mxu0 0
        %1024 = vmatprep.subr.bf16.mxu0 0
        %1025 = vmatpush1.bf16.msra.mxu0 0
        %1026 = vmatprep.subr.bf16.mxu0 0
        %1027 = vmatpush1.bf16.msra.mxu0 0
        %1028 = vmatprep.subr.bf16.mxu0 0
        %1029 = vmatpush1.bf16.msra.mxu0 0
        %1030 = vmatprep.subr.bf16.mxu0 0
        %1031 = vmatpush1.bf16.msra.mxu0 0
        %1032 = vmatprep.subr.bf16.mxu0 0
        %1033 = vmatpush1.bf16.msra.mxu0 0
        %1034 = vmatprep.mubr.bf16.mxu0 0
        %1035 = vmatmul.mubr.bf16.gmra.mrb[0].mxu0 %v997
        %v1036 = vpop.f32.mrb[0].mxu0
        %v1037 = vadd.f32 0.0, %v1036
        %v1038 = vpop.f32.mrb[0].mxu0
        %v1039 = vpop.f32.mrb[0].mxu0
        %v1040 = vpop.f32.mrb[0].mxu0
        %1041 = vdwg.mxu0
        %v1042 = vld [vmem:[#allocation2] sm:$0xff]
        %v1043 = vpack.c.bf16 %v1037, %v1037
        %v1045 = vsel %vm476, %v1043, 0
        %v1048 = vsel %vm538, %v874, 0
        %1050 = vmatprep.subr.bf16.mxu0 0
        %1051 = vmatpush1.bf16.msra.mxu0 %v1048
        %1052 = vmatprep.subr.bf16.mxu0 0
        %1053 = vmatpush1.bf16.msra.mxu0 0
        %1054 = vmatprep.subr.bf16.mxu0 0
        %1055 = vmatpush1.bf16.msra.mxu0 0
        %1056 = vmatprep.subr.bf16.mxu0 0
        %1057 = vmatpush1.bf16.msra.mxu0 0
        %1058 = vmatprep.subr.bf16.mxu0 0
        %1059 = vmatpush1.bf16.msra.mxu0 0
        %1060 = vmatprep.subr.bf16.mxu0 0
        %1061 = vmatpush1.bf16.msra.mxu0 0
        %1062 = vmatprep.subr.bf16.mxu0 0
        %1063 = vmatpush1.bf16.msra.mxu0 0
        %1064 = vmatprep.subr.bf16.mxu0 0
        %1065 = vmatpush1.bf16.msra.mxu0 0
        %1066 = vmatprep.subr.bf16.mxu0 0
        %1067 = vmatpush1.bf16.msra.mxu0 0
        %1068 = vmatprep.subr.bf16.mxu0 0
        %1069 = vmatpush1.bf16.msra.mxu0 0
        %1070 = vmatprep.subr.bf16.mxu0 0
        %1071 = vmatpush1.bf16.msra.mxu0 0
        %1072 = vmatprep.subr.bf16.mxu0 0
        %1073 = vmatpush1.bf16.msra.mxu0 0
        %1074 = vmatprep.subr.bf16.mxu0 0
        %1075 = vmatpush1.bf16.msra.mxu0 0
        %1076 = vmatprep.subr.bf16.mxu0 0
        %1077 = vmatpush1.bf16.msra.mxu0 0
        %1078 = vmatprep.subr.bf16.mxu0 0
        %1079 = vmatpush1.bf16.msra.mxu0 0
        %1080 = vmatprep.subr.bf16.mxu0 0
        %1081 = vmatpush1.bf16.msra.mxu0 0
        %1082 = vmatprep.mubr.bf16.mxu0 0
        %1083 = vmatmul.mubr.bf16.gmra.mrb[0].mxu0 %v1045
        %v1084 = vpop.f32.mrb[0].mxu0
        %v1085 = vadd.f32 0.0, %v1084
        %v1086 = vpop.f32.mrb[0].mxu0
        %v1087 = vpop.f32.mrb[0].mxu0
        %v1088 = vpop.f32.mrb[0].mxu0
        %1089 = vdwg.mxu0
        %v1090 = vadd.f32 %v1042, %v1085
        %1091 = vst.msk [vmem:[#allocation2] sm:$0xff] %vm431, %v1090
        %s1092 = sadd.s32 %s398, 3
        %s1093 = smul.u32 %s1092, 4
        %s1094 = smul.addr %s1093, 4
        %s1095 = scalar_lea.vmem %s3, %s1094
        %v1096 = vld [vmem:[%s1095] sm:$0xf]
        %v1097 = vld [vmem:[%s1095 + $0x4] sm:$0xf]
        %v1098 = vld [vmem:[%s1095 + $0x8] sm:$0xf]
        %v1099 = vld [vmem:[%s1095 + $0xc] sm:$0xf]
        %s1100 = scalar_lea.vmem %s4, %s1092
        %v1101 = vld [vmem:[%s1100] sm:$0x1]
        %s1102 = smul.addr %s1092, 4
        %s1103 = scalar_lea.vmem %s5, %s1102
        %v1104 = vld [vmem:[%s1103] sm:$0xf]
        %s1105 = scalar_lea.vmem %s378, 12
        %v1106 = vld [vmem:[%s1105] sm:$0xf]
        %s1107 = scalar_lea.vmem %s388, 12
        %v1108 = vld [vmem:[%s1107] sm:$0xf]
        %v1110 = vlaneseq
        %v1111 = vshrl.u32 %v1110, 7
        %v1112 = vsub.s32 0, %v1111
        %v1113 = vrot.slane %v1101, %v1112
        %v1119 = vunpack.c.l.b16 %v1096
        %v1120 = vunpack.c.l.b16 %v1097
        %v1121 = vunpack.c.l.b16 %v1098
        %v1122 = vunpack.c.l.b16 %v1099
        %v1123 = vpack.c.b16 %v1120, %v1119
        %v1124 = vpack.c.b16 %v1122, %v1121
        %1127 = vmatprep.subr.bf16.mxu0 0
        %1128 = vmatpush1.bf16.msra.mxu0 %v1123
        %1129 = vmatprep.subr.bf16.mxu0 0
        %1130 = vmatpush1.bf16.msra.mxu0 %v1124
        %1131 = vmatprep.subr.bf16.mxu0 0
        %1132 = vmatpush1.bf16.msra.mxu0 0
        %1133 = vmatprep.subr.bf16.mxu0 0
        %1134 = vmatpush1.bf16.msra.mxu0 0
        %1135 = vmatprep.subr.bf16.mxu0 0
        %1136 = vmatpush1.bf16.msra.mxu0 0
        %1137 = vmatprep.subr.bf16.mxu0 0
        %1138 = vmatpush1.bf16.msra.mxu0 0
        %1139 = vmatprep.subr.bf16.mxu0 0
        %1140 = vmatpush1.bf16.msra.mxu0 0
        %1141 = vmatprep.subr.bf16.mxu0 0
        %1142 = vmatpush1.bf16.msra.mxu0 0
        %1143 = vmatprep.subr.bf16.mxu0 0
        %1144 = vmatpush1.bf16.msra.mxu0 0
        %1145 = vmatprep.subr.bf16.mxu0 0
        %1146 = vmatpush1.bf16.msra.mxu0 0
        %1147 = vmatprep.subr.bf16.mxu0 0
        %1148 = vmatpush1.bf16.msra.mxu0 0
        %1149 = vmatprep.subr.bf16.mxu0 0
        %1150 = vmatpush1.bf16.msra.mxu0 0
        %1151 = vmatprep.subr.bf16.mxu0 0
        %1152 = vmatpush1.bf16.msra.mxu0 0
        %1153 = vmatprep.subr.bf16.mxu0 0
        %1154 = vmatpush1.bf16.msra.mxu0 0
        %1155 = vmatprep.subr.bf16.mxu0 0
        %1156 = vmatpush1.bf16.msra.mxu0 0
        %1157 = vmatprep.subr.bf16.mxu0 0
        %1158 = vmatpush1.bf16.msra.mxu0 0
        %1159 = vmatprep.mubr.bf16.mxu0 0
        %1160 = vmatmul.mubr.bf16.gmra.mrb[0].mxu0 %v433
        %v1161 = vpop.f32.mrb[0].mxu0
        %v1162 = vadd.f32 %v1113, %v1161
        %v1163 = vpop.f32.mrb[0].mxu0
        %v1164 = vpop.f32.mrb[0].mxu0
        %v1165 = vpop.f32.mrb[0].mxu0
        %1166 = vdwg.mxu0
        %v1167 = vpack.c.bf16 %v1162, %v1162
        %v1169 = vsel %vm476, %v1167, 0
        %v1172 = vsel %vm476, %v1106, 0
        %1174 = vmatprep.subr.bf16.mxu0 0
        %1175 = vmatpush1.bf16.xpose.msra.mxu0 %v1172
        %1176 = vmatprep.subr.bf16.mxu0 0
        %1177 = vmatpush1.bf16.xpose.msra.mxu0 0
        %1178 = vmatprep.subr.bf16.mxu0 0
        %1179 = vmatpush1.bf16.xpose.msra.mxu0 0
        %1180 = vmatprep.subr.bf16.mxu0 0
        %1181 = vmatpush1.bf16.xpose.msra.mxu0 0
        %1182 = vmatprep.subr.bf16.mxu0 0
        %1183 = vmatpush1.bf16.xpose.msra.mxu0 0
        %1184 = vmatprep.subr.bf16.mxu0 0
        %1185 = vmatpush1.bf16.xpose.msra.mxu0 0
        %1186 = vmatprep.subr.bf16.mxu0 0
        %1187 = vmatpush1.bf16.xpose.msra.mxu0 0
        %1188 = vmatprep.subr.bf16.mxu0 0
        %1189 = vmatpush1.bf16.xpose.msra.mxu0 0
        %1190 = vmatprep.subr.bf16.mxu0 0
        %1191 = vmatpush1.bf16.xpose.msra.mxu0 0
        %1192 = vmatprep.subr.bf16.mxu0 0
        %1193 = vmatpush1.bf16.xpose.msra.mxu0 0
        %1194 = vmatprep.subr.bf16.mxu0 0
        %1195 = vmatpush1.bf16.xpose.msra.mxu0 0
        %1196 = vmatprep.subr.bf16.mxu0 0
        %1197 = vmatpush1.bf16.xpose.msra.mxu0 0
        %1198 = vmatprep.subr.bf16.mxu0 0
        %1199 = vmatpush1.bf16.xpose.msra.mxu0 0
        %1200 = vmatprep.subr.bf16.mxu0 0
        %1201 = vmatpush1.bf16.xpose.msra.mxu0 0
        %1202 = vmatprep.subr.bf16.mxu0 0
        %1203 = vmatpush1.bf16.xpose.msra.mxu0 0
        %1204 = vmatprep.subr.bf16.mxu0 0
        %1205 = vmatpush1.bf16.xpose.msra.mxu0 0
        %1206 = vmatprep.mubr.bf16.mxu0 0
        %1207 = vmatmul.mubr.bf16.gmra.mrb[0].mxu0 %v1169
        %v1208 = vpop.f32.mrb[0].mxu0
        %v1209 = vadd.f32 0.0, %v1208
        %v1210 = vpop.f32.mrb[0].mxu0
        %v1211 = vpop.f32.mrb[0].mxu0
        %v1212 = vpop.f32.mrb[0].mxu0
        %1213 = vdwg.mxu0
        %v1214 = vsel %vm476, %v1209, -inf
        %1215 = vmax.xlane.f32.xlu0 %v1214
        %v1216 = vpop.xlane.xlu0 %1215
        %v1217 = vsub.f32 %v1209, %v1216
        %v1218 = vmul.f32 %v1217, 1.442695
        %v1219 = vpow.pop %v1218
        %v1220 = vsel %vm476, %v1219, 0.0
        %1221 = vadd.xlane.f32.xlu0 %v1220
        %v1222 = vpop.xlane.xlu0 %1221
        %v1223 = vrcp.pop %v1222
        %v1224 = vmul.f32 %v1219, %v1223
        %v1225 = vpack.c.bf16 %v1224, %v1224
        %v1227 = vsel %vm476, %v1225, 0
        %v1230 = vsel %vm538, %v1108, 0
        %1232 = vmatprep.subr.bf16.mxu0 0
        %1233 = vmatpush1.bf16.msra.mxu0 %v1230
        %1234 = vmatprep.subr.bf16.mxu0 0
        %1235 = vmatpush1.bf16.msra.mxu0 0
        %1236 = vmatprep.subr.bf16.mxu0 0
        %1237 = vmatpush1.bf16.msra.mxu0 0
        %1238 = vmatprep.subr.bf16.mxu0 0
        %1239 = vmatpush1.bf16.msra.mxu0 0
        %1240 = vmatprep.subr.bf16.mxu0 0
        %1241 = vmatpush1.bf16.msra.mxu0 0
        %1242 = vmatprep.subr.bf16.mxu0 0
        %1243 = vmatpush1.bf16.msra.mxu0 0
        %1244 = vmatprep.subr.bf16.mxu0 0
        %1245 = vmatpush1.bf16.msra.mxu0 0
        %1246 = vmatprep.subr.bf16.mxu0 0
        %1247 = vmatpush1.bf16.msra.mxu0 0
        %1248 = vmatprep.subr.bf16.mxu0 0
        %1249 = vmatpush1.bf16.msra.mxu0 0
        %1250 = vmatprep.subr.bf16.mxu0 0
        %1251 = vmatpush1.bf16.msra.mxu0 0
        %1252 = vmatprep.subr.bf16.mxu0 0
        %1253 = vmatpush1.bf16.msra.mxu0 0
        %1254 = vmatprep.subr.bf16.mxu0 0
        %1255 = vmatpush1.bf16.msra.mxu0 0
        %1256 = vmatprep.subr.bf16.mxu0 0
        %1257 = vmatpush1.bf16.msra.mxu0 0
        %1258 = vmatprep.subr.bf16.mxu0 0
        %1259 = vmatpush1.bf16.msra.mxu0 0
        %1260 = vmatprep.subr.bf16.mxu0 0
        %1261 = vmatpush1.bf16.msra.mxu0 0
        %1262 = vmatprep.subr.bf16.mxu0 0
        %1263 = vmatpush1.bf16.msra.mxu0 0
        %1264 = vmatprep.mubr.bf16.mxu0 0
        %1265 = vmatmul.mubr.bf16.gmra.mrb[0].mxu0 %v1227
        %v1266 = vpop.f32.mrb[0].mxu0
        %v1267 = vadd.f32 0.0, %v1266
        %v1268 = vpop.f32.mrb[0].mxu0
        %v1269 = vpop.f32.mrb[0].mxu0
        %v1270 = vpop.f32.mrb[0].mxu0
        %1271 = vdwg.mxu0
        %v1272 = vld [vmem:[#allocation2] sm:$0xff]
        %v1273 = vpack.c.bf16 %v1267, %v1267
        %v1275 = vsel %vm476, %v1273, 0
        %v1278 = vsel %vm538, %v1104, 0
        %1280 = vmatprep.subr.bf16.mxu0 0
        %1281 = vmatpush1.bf16.msra.mxu0 %v1278
        %1282 = vmatprep.subr.bf16.mxu0 0
        %1283 = vmatpush1.bf16.msra.mxu0 0
        %1284 = vmatprep.subr.bf16.mxu0 0
        %1285 = vmatpush1.bf16.msra.mxu0 0
        %1286 = vmatprep.subr.bf16.mxu0 0
        %1287 = vmatpush1.bf16.msra.mxu0 0
        %1288 = vmatprep.subr.bf16.mxu0 0
        %1289 = vmatpush1.bf16.msra.mxu0 0
        %1290 = vmatprep.subr.bf16.mxu0 0
        %1291 = vmatpush1.bf16.msra.mxu0 0
        %1292 = vmatprep.subr.bf16.mxu0 0
        %1293 = vmatpush1.bf16.msra.mxu0 0
        %1294 = vmatprep.subr.bf16.mxu0 0
        %1295 = vmatpush1.bf16.msra.mxu0 0
        %1296 = vmatprep.subr.bf16.mxu0 0
        %1297 = vmatpush1.bf16.msra.mxu0 0
        %1298 = vmatprep.subr.bf16.mxu0 0
        %1299 = vmatpush1.bf16.msra.mxu0 0
        %1300 = vmatprep.subr.bf16.mxu0 0
        %1301 = vmatpush1.bf16.msra.mxu0 0
        %1302 = vmatprep.subr.bf16.mxu0 0
        %1303 = vmatpush1.bf16.msra.mxu0 0
        %1304 = vmatprep.subr.bf16.mxu0 0
        %1305 = vmatpush1.bf16.msra.mxu0 0
        %1306 = vmatprep.subr.bf16.mxu0 0
        %1307 = vmatpush1.bf16.msra.mxu0 0
        %1308 = vmatprep.subr.bf16.mxu0 0
        %1309 = vmatpush1.bf16.msra.mxu0 0
        %1310 = vmatprep.subr.bf16.mxu0 0
        %1311 = vmatpush1.bf16.msra.mxu0 0
        %1312 = vmatprep.mubr.bf16.mxu0 0
        %1313 = vmatmul.mubr.bf16.gmra.mrb[0].mxu0 %v1275
        %v1314 = vpop.f32.mrb[0].mxu0
        %v1315 = vadd.f32 0.0, %v1314
        %v1316 = vpop.f32.mrb[0].mxu0
        %v1317 = vpop.f32.mrb[0].mxu0
        %v1318 = vpop.f32.mrb[0].mxu0
        %1319 = vdwg.mxu0
        %v1320 = vadd.f32 %v1272, %v1315
        %1321 = vst.msk [vmem:[#allocation2] sm:$0xff] %vm431, %v1320
        // Predicated region
        $region57: #{tpu_custom_call.1} parent=47 // pred_check
          %p1322 = pneg %p391
        $region58: #{tpu_custom_call.1} parent=47 // pred_check_branch
          %1324 = sbr.rel (%p1322) target = $region60
        $region59: #{tpu_custom_call.1} parent=47 // pred_region
          %v1325 = vld [vmem:[#allocation2] sm:$0xff]
          %v1326 = vld [vmem:[%s6] sm:$0x1]
          %v1328 = vlaneseq
          %v1329 = vshrl.u32 %v1328, 7
          %v1330 = vsub.s32 0, %v1329
          %v1331 = vrot.slane %v1326, %v1330
          %v1333 = vadd.f32 %v1325, %v1331
          %1334 = vst.msk [vmem:[%s369] sm:$0xff] %vm431, %v1333
        $region60: #{tpu_custom_call.1} parent=47 // pred_fallthru
          _
        %s1335 = sand.u32 %s221, 1
        %s1336 = scalar_lea.sflag [#allocation5], %s1335
        %s1337 = sand.u32 %s221, 1
        %s1338 = smul.addr %s1337, 8
        %s1339 = scalar_lea.vmem [#allocation6], %s1338
        // Predicated region
        $region61: #{tpu_custom_call.1} parent=47 // pred_check
          %p1340 = pneg %p231
        $region62: #{tpu_custom_call.1} parent=47 // pred_check_branch
          %1342 = sbr.rel (%p1340) target = $region64
        $region63: #{tpu_custom_call.1} parent=47 // pred_region
          %s1344 = ssub.s32 128, 128
          %1345 = vsyncadd %s1336, %s1344
          %s1346 = sadd.s32 %s30, %s29
          %s1347 = smul.addr %s1346, 128
          %s1348 = scalar_lea.hbm %s7, %s1347
          %s1350 = sshll.u32 %s1339, 4
          %s1351 = int_to_ptr.vmem [resolvable:$true] %s1350
          %1353 = dma.vmem_to_hbm [thread:$0]  %s1351, 128, %s1348, %s1336
        $region64: #{tpu_custom_call.1} parent=47 // pred_fallthru
          _
      $region48: #{tpu_custom_call.1} parent=5 // pred_fallthru
        _
      %p1354 = scmp.le.s32.totalorder 2, %s19
      // Predicated region
      $region65: #{tpu_custom_call.1} parent=5 // pred_check
        %p1355 = pneg %p1354
      $region66: #{tpu_custom_call.1} parent=5 // pred_check_branch
        %1357 = sbr.rel (%p1355) target = $region68
      $region67: #{tpu_custom_call.1} parent=5 // pred_region
        %s1358 = ssub.s32 %s19, 2
        // Predicated region
        $region69: #{tpu_custom_call.1} parent=67 // pred_check
          %p1359 = pneg %p237
        $region70: #{tpu_custom_call.1} parent=67 // pred_check_branch
          %1361 = sbr.rel (%p1359) target = $region72
        $region71: #{tpu_custom_call.1} parent=67 // pred_region
          %s1362 = sand.u32 %s222, 1
          %s1363 = scalar_lea.sflag [#allocation5], %s1362
          %s1364 = sand.u32 %s222, 1
          %s1365 = smul.addr %s1364, 8
          %s1366 = scalar_lea.vmem [#allocation6], %s1365
          %1367 = dma.done %s1363, 128
        $region72: #{tpu_custom_call.1} parent=67 // pred_fallthru
          _
      $region68: #{tpu_custom_call.1} parent=5 // pred_fallthru
        _
    $region6: #{tpu_custom_call.1} parent=1 // loop_footer
      %s23 = sadd.s32 1, %s19
    $region7: #{tpu_custom_call.1} parent=1 // loop_footer_branch
      %18 = sbr.rel target = $region3
    $region8: #{tpu_custom_call.1} parent=1 // loop_exit
      _
    %1368 = vsyncpa [#allocation4], 1
    %s1369 = scalar_lea.sflag [#allocation4], 1
    %1370 = vsyncpa %s1369, 1
    %1371 = vsyncpa [#allocation5], 1
    %s1372 = scalar_lea.sflag [#allocation5], 1
    %1373 = vsyncpa %s1372, 1

</llo_original>
